<compile_context>
chip_gen: v6e
topology: v6e:2x2x1
jax: 0.10.0
libtpu: 0.0.40
codegen_flags: <defaults>
</compile_context>

<pallas_src>
import functools
import math

import jax
import jax.numpy as jnp
from jax import lax
from jax.experimental import pallas as pl
from jax.experimental.pallas import tpu as pltpu


# ----------------------------- in-kernel helpers -----------------------------

_SQRT_2_OVER_PI = 0.7978845608028654


def _gelu(x):
    # tanh-approx GELU (EUP tanh).  torch.nn.GELU() default is exact erf; the
    # tanh form deviates by <~1e-3 but keeps the heavy work off the VALU slot.
    return 0.5 * x * (1.0 + jnp.tanh(_SQRT_2_OVER_PI * (x + 0.044715 * x * x * x)))


def _layernorm(x, g, b, eps=1e-5):
    m = jnp.mean(x, axis=-1, keepdims=True)
    v = jnp.mean((x - m) ** 2, axis=-1, keepdims=True)
    return (x - m) * lax.rsqrt(v + eps) * g + b


def _bf16(x):
    return x.astype(jnp.bfloat16)


# ------------------------- fused ByteNet stack kernel -------------------------

def _bytenet_stack_kernel(starts_ref,
                          x_ref, c_ref, mask_ref,
                          ln1g_ref, ln1b_ref, w1_ref, b1_ref,
                          cmw_ref, cmb_ref,
                          lnmg_ref, lnmb_ref,
                          convw_ref, convb_ref,
                          ln2g_ref, ln2b_ref, w2_ref, b2_ref,
                          dlng_ref, dlnb_ref, decw_ref, decb_ref,
                          out_ref,
                          xstate_ref, hpad_ref,
                          *, L, d_h, K, P_pad):
    li = pl.program_id(1)

    @pl.when(li == 0)
    def _():
        # New batch element: load the modulated embedding into the resident
        # residual buffer and zero the conv halo padding once.
        xstate_ref[...] = x_ref[0]
        hpad_ref[...] = jnp.zeros_like(hpad_ref)

    x = xstate_ref[...]                                        # (L, D) f32

    # sequence1: LayerNorm(D) -> GELU -> PositionFeedForward(D -> d_h)
    h = _gelu(_layernorm(x, ln1g_ref[0, 0], ln1b_ref[0, 0]))
    h = jnp.dot(_bf16(h), w1_ref[0], preferred_element_type=jnp.float32) + b1_ref[0, 0]

    # fused c_mod projection + modulate_fused: c_mod.chunk(2,-1) = (shift, scale)
    cmod = (jnp.dot(_bf16(c_ref[0]), cmw_ref[0], preferred_element_type=jnp.float32)
            + cmb_ref[0, 0])                                   # (L, 2*d_h)
    shift = cmod[:, :d_h]
    scale = cmod[:, d_h:]
    h = h * (1.0 + scale) + shift

    # sequence_mod: LayerNorm(d_h) -> GELU
    h = _gelu(_layernorm(h, lnmg_ref[0, 0], lnmb_ref[0, 0]))

    # TODO(synk): F.dropout(x, p) runs in train mode (stochastic) in the
    # reference; implemented here as deterministic eval-mode identity.

    # MaskedConv1d: mask, write into zero-padded scratch, gather the K dilated
    # taps with dynamic slices, do ONE (L, K*d_h) x (K*d_h, d_h) MXU matmul.
    hpad_ref[pl.ds(P_pad, L), :] = h * mask_ref[0]
    taps = [hpad_ref[pl.ds(starts_ref[li, k], L), :] for k in range(K)]
    hcat = jnp.concatenate(taps, axis=-1)                      # (L, K*d_h)
    y = (jnp.dot(_bf16(hcat), convw_ref[0], preferred_element_type=jnp.float32)
         + convb_ref[0, 0])

    # sequence2: LayerNorm(d_h) -> GELU -> PositionFeedForward(d_h -> D)
    y = _gelu(_layernorm(y, ln2g_ref[0, 0], ln2b_ref[0, 0]))
    y = jnp.dot(_bf16(y), w2_ref[0], preferred_element_type=jnp.float32) + b2_ref[0, 0]

    x_new = x + y                                              # residual
    xstate_ref[...] = x_new

    # Fused decoder at the last layer: last_norm + (D x V_pad) matmul,
    # lane-dense (128-wide) output store.
    @pl.when(li == pl.num_programs(1) - 1)
    def _():
        hf = _layernorm(x_new, dlng_ref[0], dlnb_ref[0])
        out_ref[0] = (jnp.dot(_bf16(hf), decw_ref[...],
                              preferred_element_type=jnp.float32)
                      + decb_ref[0]).astype(out_ref.dtype)


def bytenet_stack_apply(x, c, mask, stack, dec, starts, *, kernel_size, P_pad):
    """All ByteNet blocks + final LayerNorm + decoder in one pallas_call."""
    N, L, D = x.shape
    d_emb = c.shape[-1]
    n_layer, _, d_h = stack['b1'].shape
    K = kernel_size
    Vp = dec['dec_w'].shape[-1]

    kern = functools.partial(_bytenet_stack_kernel, L=L, d_h=d_h, K=K, P_pad=P_pad)

    def batch_blk(shape):
        return pl.BlockSpec(shape, lambda b, l, s: (b, 0, 0))

    def layer_blk(shape):
        return pl.BlockSpec(shape, lambda b, l, s: (l, 0, 0))

    def const_blk(shape):
        nd = len(shape)
        return pl.BlockSpec(shape, lambda b, l, s, _nd=nd: (0,) * _nd)

    in_specs = [
        batch_blk((1, L, D)),                 # x (modulated embedding)
        batch_blk((1, L, d_emb)),             # c (block conditioning)
        batch_blk((1, L, 1)),                 # input_mask
        layer_blk((1, 1, D)),                 # ln1 gamma
        layer_blk((1, 1, D)),                 # ln1 beta
        layer_blk((1, D, d_h)),               # PFF1 W (bf16)
        layer_blk((1, 1, d_h)),               # PFF1 b
        layer_blk((1, d_emb, 2 * d_h)),       # c_mod W (bf16)
        layer_blk((1, 1, 2 * d_h)),           # c_mod b
        layer_blk((1, 1, d_h)),               # ln_mod gamma
        layer_blk((1, 1, d_h)),               # ln_mod beta
        layer_blk((1, K * d_h, d_h)),         # conv W, taps stacked (bf16)
        layer_blk((1, 1, d_h)),               # conv b
        layer_blk((1, 1, d_h)),               # ln2 gamma
        layer_blk((1, 1, d_h)),               # ln2 beta
        layer_blk((1, d_h, D)),               # PFF2 W (bf16)
        layer_blk((1, 1, D)),                 # PFF2 b
        const_blk((1, D)),                    # last_norm gamma
        const_blk((1, D)),                    # last_norm beta
        const_blk((D, Vp)),                   # decoder W (vocab padded, bf16)
        const_blk((1, Vp)),                   # decoder b
    ]

    grid_spec = pltpu.PrefetchScalarGridSpec(
        num_scalar_prefetch=1,
        grid=(N, n_layer),
        in_specs=in_specs,
        out_specs=pl.BlockSpec((1, L, Vp), lambda b, l, s: (b, 0, 0)),
        scratch_shapes=[
            pltpu.VMEM((L, D), jnp.float32),                # resident residual stream
            pltpu.VMEM((L + 2 * P_pad, d_h), jnp.float32),  # zero-padded conv buffer
        ],
    )

    return pl.pallas_call(
        kern,
        out_shape=jax.ShapeDtypeStruct((N, L, Vp), jnp.float32),
        grid_spec=grid_spec,
        compiler_params=pltpu.CompilerParams(
            dimension_semantics=("parallel", "arbitrary")),
    )(starts, x, c, mask,
      stack['ln1_g'], stack['ln1_b'], stack['w1'], stack['b1'],
      stack['cm_w'], stack['cm_b'],
      stack['lnm_g'], stack['lnm_b'],
      stack['conv_w'], stack['conv_b'],
      stack['ln2_g'], stack['ln2_b'], stack['w2'], stack['b2'],
      dec['ln_g'], dec['ln_b'], dec['dec_w'], dec['dec_b'])


# ----------------------------- plain-JAX glue ---------------------------------

def timestep_embedding(t, dim, max_period=10000.0):
    # NOTE: the reference hard-codes 2 * 3.14159 (not 2*pi); kept verbatim.
    half = dim // 2
    freqs = 2.0 * 3.14159 * jnp.exp(
        -math.log(max_period)
        * (jnp.arange(half, dtype=jnp.float32) - half / 3.0) / half)
    args = t.astype(jnp.float32)[:, None] * freqs[None, :]
    return jnp.concatenate([jnp.cos(args), jnp.sin(args)], axis=-1)


def timestep_embedder(p, t, freq_dim):
    e = timestep_embedding(t, freq_dim)
    h = jax.nn.silu(e @ p['w1'] + p['b1'])
    return h @ p['w2'] + p['b2']


def bytenet_lm_time_forward(params, tokens, t, input_mask, S, *,
                            dilations, kernel_size, freq_dim, n_tokens):
    del t  # schedule_conditioning=True branch: t is unused
    N, L = tokens.shape
    x = jnp.take(params['embed'], tokens, axis=0)              # (N, L, d_model)

    S_flat = S.reshape(-1)
    s_out = jax.nn.silu(timestep_embedder(params['s_in'], S_flat, freq_dim))
    s_out = s_out.reshape(N, L, -1)
    shift, scale = jnp.split(s_out, 2, axis=-1)                # chunk(2, -1)
    x = x * (1.0 + scale) + shift                              # modulate_fused

    c = jax.nn.silu(timestep_embedder(params['s_blk'], S_flat, freq_dim))
    c = c.reshape(N, L, -1)                                    # (N, L, d_emb)

    mask3 = input_mask.astype(jnp.float32)[:, :, None]         # (N, L, 1)

    # Per-layer conv tap start offsets into the zero-padded scratch buffer:
    # out[l] of tap k reads in[l + k*dil - dil*(K-1)//2]  (SAME zero padding).
    K = kernel_size
    p_max = max(d * (K - 1) // 2 for d in dilations)
    P_pad = max(8, ((p_max + 7) // 8) * 8)                     # sublane-aligned halo
    starts = jnp.asarray(
        [[P_pad - d * (K - 1) // 2 + k * d for k in range(K)] for d in dilations],
        dtype=jnp.int32)

    logits = bytenet_stack_apply(x, c, mask3, params['stack'], params['dec'],
                                 starts, kernel_size=K, P_pad=P_pad)
    return logits[..., :n_tokens]                              # drop lane padding


# ----------------------------- deterministic init -----------------------------

def _rand(key, shape, dtype=jnp.float32, scale=0.05):
    return (scale * jax.random.normal(key, shape, dtype=jnp.float32)).astype(dtype)


def init_params(key, *, n_tokens, d_model, d_h, d_emb, n_layer, kernel_size, freq_dim):
    K = kernel_size
    Vp = ((n_tokens + 127) // 128) * 128
    bf = jnp.bfloat16
    keys = jax.random.split(key, 8)
    p = {}
    p['embed'] = _rand(keys[0], (n_tokens, d_model), scale=1.0)

    # TimestepEmbedderNew MLPs; reference zero-inits s_embed_input.mlp[2].
    p['s_in'] = {
        'w1': _rand(keys[1], (freq_dim, 2 * d_model)),
        'b1': jnp.zeros((2 * d_model,), jnp.float32),
        'w2': jnp.zeros((2 * d_model, 2 * d_model), jnp.float32),
        'b2': jnp.zeros((2 * d_model,), jnp.float32),
    }
    p['s_blk'] = {
        'w1': _rand(keys[2], (freq_dim, d_emb)),
        'b1': jnp.zeros((d_emb,), jnp.float32),
        'w2': _rand(keys[3], (d_emb, d_emb)),
        'b2': jnp.zeros((d_emb,), jnp.float32),
    }

    ks = jax.random.split(keys[4], 8)
    p['stack'] = {
        'ln1_g': jnp.ones((n_layer, 1, d_model), jnp.float32),
        'ln1_b': jnp.zeros((n_layer, 1, d_model), jnp.float32),
        'w1': _rand(ks[0], (n_layer, d_model, d_h), bf),
        'b1': _rand(ks[1], (n_layer, 1, d_h)),
        # reference zero-inits the per-layer c_mod linears
        'cm_w': jnp.zeros((n_layer, d_emb, 2 * d_h), bf),
        'cm_b': jnp.zeros((n_layer, 1, 2 * d_h), jnp.float32),
        'lnm_g': jnp.ones((n_layer, 1, d_h), jnp.float32),
        'lnm_b': jnp.zeros((n_layer, 1, d_h), jnp.float32),
        # conv weight stored pre-stacked as (layer, K*d_h_in, d_h_out):
        # row k*d_h + cin  <->  torch Conv1d weight[co, cin, k]
        'conv_w': _rand(ks[2], (n_layer, K * d_h, d_h), bf),
        'conv_b': _rand(ks[3], (n_layer, 1, d_h)),
        'ln2_g': jnp.ones((n_layer, 1, d_h), jnp.float32),
        'ln2_b': jnp.zeros((n_layer, 1, d_h), jnp.float32),
        'w2': _rand(ks[4], (n_layer, d_h, d_model), bf),
        'b2': _rand(ks[5], (n_layer, 1, d_model)),
    }

    kd = jax.random.split(keys[5], 2)
    dec_w = jnp.zeros((d_model, Vp), jnp.float32)
    dec_w = dec_w.at[:, :n_tokens].set(_rand(kd[0], (d_model, n_tokens)))
    dec_b = jnp.zeros((1, Vp), jnp.float32)
    dec_b = dec_b.at[:, :n_tokens].set(_rand(kd[1], (1, n_tokens)))
    p['dec'] = {
        'ln_g': jnp.ones((1, d_model), jnp.float32),
        'ln_b': jnp.zeros((1, d_model), jnp.float32),
        'dec_w': dec_w.astype(bf),   # vocab padded to a full 128-lane tile
        'dec_b': dec_b,
    }
    return p


# ----------------------------------- main -------------------------------------

if __name__ == "__main__":
    # small shapes consistent with the module (simple_embed=True, slim=True,
    # schedule_conditioning=True)
    N, L = 2, 16
    n_tokens = 31
    d_model = 128
    d_h = d_model // 2          # slim=True
    d_emb = 32                  # d_embedding
    n_layer = 2
    kernel_size = 5
    r = 128
    freq_dim = 1280             # TimestepEmbedderNew default

    log2 = int(math.log2(r)) + 1
    dilations = [2 ** (n % log2) for n in range(n_layer)]   # [1, 2]

    key = jax.random.PRNGKey(0)
    kp, kx, ks_, kt = jax.random.split(key, 4)
    params = init_params(kp, n_tokens=n_tokens, d_model=d_model, d_h=d_h,
                         d_emb=d_emb, n_layer=n_layer, kernel_size=kernel_size,
                         freq_dim=freq_dim)

    tokens = jax.random.randint(kx, (N, L), 0, n_tokens)               # (N, L) ints
    t = jax.random.uniform(kt, (N,), minval=0.0, maxval=1.0)           # unused branch
    S = jax.random.uniform(ks_, (N, L), minval=0.0, maxval=10.0)       # schedule cond.
    input_mask = jnp.ones((N, L), jnp.float32).at[1, L - 3:].set(0.0)  # (N, L)

    out = bytenet_lm_time_forward(params, tokens, t, input_mask, S,
                                  dilations=dilations, kernel_size=kernel_size,
                                  freq_dim=freq_dim, n_tokens=n_tokens)
    out = jax.block_until_ready(out)
    assert out.shape == (N, L, n_tokens) and out.dtype == jnp.float32
    print("KERNEL_OK")
</pallas_src>

<mosaic_0001>
module attributes {stable_mosaic.version = 11 : i64} {
  func.func @_bytenet_stack_kernel(%arg0: i32, %arg1: i32, %arg2: memref<2x5xi32, #tpu.memory_space<smem>>, %arg3: memref<1x16x128xf32, #tpu.memory_space<vmem>>, %arg4: memref<1x16x32xf32, #tpu.memory_space<vmem>>, %arg5: memref<1x16x1xf32, #tpu.memory_space<vmem>>, %arg6: memref<1x1x128xf32, #tpu.memory_space<vmem>>, %arg7: memref<1x1x128xf32, #tpu.memory_space<vmem>>, %arg8: memref<1x128x64xbf16, #tpu.memory_space<vmem>>, %arg9: memref<1x1x64xf32, #tpu.memory_space<vmem>>, %arg10: memref<1x32x128xbf16, #tpu.memory_space<vmem>>, %arg11: memref<1x1x128xf32, #tpu.memory_space<vmem>>, %arg12: memref<1x1x64xf32, #tpu.memory_space<vmem>>, %arg13: memref<1x1x64xf32, #tpu.memory_space<vmem>>, %arg14: memref<1x320x64xbf16, #tpu.memory_space<vmem>>, %arg15: memref<1x1x64xf32, #tpu.memory_space<vmem>>, %arg16: memref<1x1x64xf32, #tpu.memory_space<vmem>>, %arg17: memref<1x1x64xf32, #tpu.memory_space<vmem>>, %arg18: memref<1x64x128xbf16, #tpu.memory_space<vmem>>, %arg19: memref<1x1x128xf32, #tpu.memory_space<vmem>>, %arg20: memref<1x128xf32, #tpu.memory_space<vmem>>, %arg21: memref<1x128xf32, #tpu.memory_space<vmem>>, %arg22: memref<128x128xbf16, #tpu.memory_space<vmem>>, %arg23: memref<1x128xf32, #tpu.memory_space<vmem>>, %arg24: memref<1x16x128xf32, #tpu.memory_space<vmem>>, %arg25: memref<16x128xf32, #tpu.memory_space<vmem>>, %arg26: memref<32x64xf32, #tpu.memory_space<vmem>>) attributes {dimension_semantics = [#tpu.dimension_semantics<parallel>, #tpu.dimension_semantics<arbitrary>], iteration_bounds = array<i64: 2, 2>, scalar_prefetch = 1 : i64, scratch_operands = 2 : i64, tpu.core_type = #tpu.core_type<tc>, window_params = [{transform_indices = @transform_0, window_bounds = array<i64: 1, 16, 128>}, {transform_indices = @transform_1, window_bounds = array<i64: 1, 16, 32>}, {transform_indices = @transform_2, window_bounds = array<i64: 1, 16, 1>}, {transform_indices = @transform_3, window_bounds = array<i64: 1, 1, 128>}, {transform_indices = @transform_4, window_bounds = array<i64: 1, 1, 128>}, {transform_indices = @transform_5, window_bounds = array<i64: 1, 128, 64>}, {transform_indices = @transform_6, window_bounds = array<i64: 1, 1, 64>}, {transform_indices = @transform_7, window_bounds = array<i64: 1, 32, 128>}, {transform_indices = @transform_8, window_bounds = array<i64: 1, 1, 128>}, {transform_indices = @transform_9, window_bounds = array<i64: 1, 1, 64>}, {transform_indices = @transform_10, window_bounds = array<i64: 1, 1, 64>}, {transform_indices = @transform_11, window_bounds = array<i64: 1, 320, 64>}, {transform_indices = @transform_12, window_bounds = array<i64: 1, 1, 64>}, {transform_indices = @transform_13, window_bounds = array<i64: 1, 1, 64>}, {transform_indices = @transform_14, window_bounds = array<i64: 1, 1, 64>}, {transform_indices = @transform_15, window_bounds = array<i64: 1, 64, 128>}, {transform_indices = @transform_16, window_bounds = array<i64: 1, 1, 128>}, {pipeline_mode = #tpu.pipeline_mode<synchronous>, transform_indices = @transform_17, window_bounds = array<i64: 1, 128>}, {pipeline_mode = #tpu.pipeline_mode<synchronous>, transform_indices = @transform_18, window_bounds = array<i64: 1, 128>}, {pipeline_mode = #tpu.pipeline_mode<synchronous>, transform_indices = @transform_19, window_bounds = array<i64: 128, 128>}, {pipeline_mode = #tpu.pipeline_mode<synchronous>, transform_indices = @transform_20, window_bounds = array<i64: 1, 128>}, {transform_indices = @transform_21, window_bounds = array<i64: 1, 16, 128>}]} {
    %c0_i32 = arith.constant 0 : i32
    %0 = arith.cmpi eq, %arg1, %c0_i32 : i32
    %1 = arith.extui %0 : i1 to i32
    %c0_i32_0 = arith.constant 0 : i32
    %2 = arith.cmpi ne, %1, %c0_i32_0 : i32
    scf.if %2 {
      %c0_91 = arith.constant 0 : index
      %c0_92 = arith.constant 0 : index
      %c0_93 = arith.constant 0 : index
      %202 = vector.load %arg3[%c0_91, %c0_92, %c0_93] : memref<1x16x128xf32, #tpu.memory_space<vmem>>, vector<1x16x128xf32>
      %203 = vector.shape_cast %202 : vector<1x16x128xf32> to vector<16x128xf32>
      %c0_94 = arith.constant 0 : index
      %c0_95 = arith.constant 0 : index
      %204 = vector.load %arg25[%c0_94, %c0_95] : memref<16x128xf32, #tpu.memory_space<vmem>>, vector<16x128xf32>
      tpu.vector_store %arg25[%c0_94, %c0_95], %203 {strides = array<i32>} : memref<16x128xf32, #tpu.memory_space<vmem>>, vector<16x128xf32>,
      %cst_96 = arith.constant 0.000000e+00 : f32
      %205 = vector.broadcast %cst_96 : f32 to vector<32x64xf32>
      %c0_97 = arith.constant 0 : index
      %c0_98 = arith.constant 0 : index
      %206 = vector.load %arg26[%c0_97, %c0_98] : memref<32x64xf32, #tpu.memory_space<vmem>>, vector<32x64xf32>
      tpu.vector_store %arg26[%c0_97, %c0_98], %205 {strides = array<i32>} : memref<32x64xf32, #tpu.memory_space<vmem>>, vector<32x64xf32>,
    } else {
    }
    %c0 = arith.constant 0 : index
    %c0_1 = arith.constant 0 : index
    %3 = vector.load %arg25[%c0, %c0_1] : memref<16x128xf32, #tpu.memory_space<vmem>>, vector<16x128xf32>
    %c0_2 = arith.constant 0 : index
    %c0_3 = arith.constant 0 : index
    %c0_4 = arith.constant 0 : index
    %4 = vector.load %arg6[%c0_2, %c0_3, %c0_4] : memref<1x1x128xf32, #tpu.memory_space<vmem>>, vector<1x1x128xf32>
    %5 = vector.shape_cast %4 : vector<1x1x128xf32> to vector<128xf32>
    %c0_5 = arith.constant 0 : index
    %c0_6 = arith.constant 0 : index
    %c0_7 = arith.constant 0 : index
    %6 = vector.load %arg7[%c0_5, %c0_6, %c0_7] : memref<1x1x128xf32, #tpu.memory_space<vmem>>, vector<1x1x128xf32>
    %7 = vector.shape_cast %6 : vector<1x1x128xf32> to vector<128xf32>
    %cst = arith.constant dense<0.000000e+00> : vector<16xf32>
    %8 = vector.multi_reduction <add>, %3, %cst [1] : vector<16x128xf32> to vector<16xf32>
    %9 = vector.shape_cast %8 : vector<16xf32> to vector<16x1xf32>
    %cst_8 = arith.constant 1.280000e+02 : f32
    %10 = vector.broadcast %cst_8 : f32 to vector<16x1xf32>
    %11 = arith.divf %9, %10 : vector<16x1xf32>
    %12 = vector.broadcast %11 : vector<16x1xf32> to vector<16x128xf32>
    %13 = arith.subf %3, %12 : vector<16x128xf32>
    %14 = arith.mulf %13, %13 : vector<16x128xf32>
    %cst_9 = arith.constant dense<0.000000e+00> : vector<16xf32>
    %15 = vector.multi_reduction <add>, %14, %cst_9 [1] : vector<16x128xf32> to vector<16xf32>
    %16 = vector.shape_cast %15 : vector<16xf32> to vector<16x1xf32>
    %cst_10 = arith.constant 1.280000e+02 : f32
    %17 = vector.broadcast %cst_10 : f32 to vector<16x1xf32>
    %18 = arith.divf %16, %17 : vector<16x1xf32>
    %19 = vector.broadcast %11 : vector<16x1xf32> to vector<16x128xf32>
    %20 = arith.subf %3, %19 : vector<16x128xf32>
    %cst_11 = arith.constant 9.99999974E-6 : f32
    %21 = vector.broadcast %cst_11 : f32 to vector<16x1xf32>
    %22 = arith.addf %18, %21 : vector<16x1xf32>
    %23 = math.rsqrt %22 : vector<16x1xf32>
    %24 = vector.broadcast %23 : vector<16x1xf32> to vector<16x128xf32>
    %25 = arith.mulf %20, %24 : vector<16x128xf32>
    %26 = vector.shape_cast %5 : vector<128xf32> to vector<1x128xf32>
    %27 = vector.broadcast %26 : vector<1x128xf32> to vector<16x128xf32>
    %28 = arith.mulf %25, %27 : vector<16x128xf32>
    %29 = vector.shape_cast %7 : vector<128xf32> to vector<1x128xf32>
    %30 = vector.broadcast %29 : vector<1x128xf32> to vector<16x128xf32>
    %31 = arith.addf %28, %30 : vector<16x128xf32>
    %cst_12 = arith.constant 5.000000e-01 : f32
    %32 = vector.broadcast %cst_12 : f32 to vector<16x128xf32>
    %33 = arith.mulf %32, %31 : vector<16x128xf32>
    %cst_13 = arith.constant 4.471500e-02 : f32
    %34 = vector.broadcast %cst_13 : f32 to vector<16x128xf32>
    %35 = arith.mulf %34, %31 : vector<16x128xf32>
    %36 = arith.mulf %35, %31 : vector<16x128xf32>
    %37 = arith.mulf %36, %31 : vector<16x128xf32>
    %38 = arith.addf %31, %37 : vector<16x128xf32>
    %cst_14 = arith.constant 0.797884583 : f32
    %39 = vector.broadcast %cst_14 : f32 to vector<16x128xf32>
    %40 = arith.mulf %39, %38 : vector<16x128xf32>
    %41 = math.tanh %40 : vector<16x128xf32>
    %cst_15 = arith.constant 1.000000e+00 : f32
    %42 = vector.broadcast %cst_15 : f32 to vector<16x128xf32>
    %43 = arith.addf %42, %41 : vector<16x128xf32>
    %44 = arith.mulf %33, %43 : vector<16x128xf32>
    %45 = arith.truncf %44 : vector<16x128xf32> to vector<16x128xbf16>
    %c0_16 = arith.constant 0 : index
    %c0_17 = arith.constant 0 : index
    %c0_18 = arith.constant 0 : index
    %46 = vector.load %arg8[%c0_16, %c0_17, %c0_18] : memref<1x128x64xbf16, #tpu.memory_space<vmem>>, vector<1x128x64xbf16>
    %47 = vector.shape_cast %46 : vector<1x128x64xbf16> to vector<128x64xbf16>
    %cst_19 = arith.constant dense<0.000000e+00> : vector<16x64xf32>
    %48 = tpu.matmul %45, %47, %cst_19 {dimension_numbers = #tpu.dot_dimension_numbers<[1], [0], [0], [1], [0, 0, 1, 1], [], []>} : vector<16x128xbf16>, vector<128x64xbf16>, vector<16x64xf32> -> vector<16x64xf32>
    %c0_20 = arith.constant 0 : index
    %c0_21 = arith.constant 0 : index
    %c0_22 = arith.constant 0 : index
    %49 = vector.load %arg9[%c0_20, %c0_21, %c0_22] : memref<1x1x64xf32, #tpu.memory_space<vmem>>, vector<1x1x64xf32>
    %50 = vector.shape_cast %49 : vector<1x1x64xf32> to vector<64xf32>
    %51 = vector.shape_cast %50 : vector<64xf32> to vector<1x64xf32>
    %52 = vector.broadcast %51 : vector<1x64xf32> to vector<16x64xf32>
    %53 = arith.addf %48, %52 : vector<16x64xf32>
    %c0_23 = arith.constant 0 : index
    %c0_24 = arith.constant 0 : index
    %c0_25 = arith.constant 0 : index
    %54 = vector.load %arg4[%c0_23, %c0_24, %c0_25] : memref<1x16x32xf32, #tpu.memory_space<vmem>>, vector<1x16x32xf32>
    %55 = vector.shape_cast %54 : vector<1x16x32xf32> to vector<16x32xf32>
    %56 = arith.truncf %55 : vector<16x32xf32> to vector<16x32xbf16>
    %c0_26 = arith.constant 0 : index
    %c0_27 = arith.constant 0 : index
    %c0_28 = arith.constant 0 : index
    %57 = vector.load %arg10[%c0_26, %c0_27, %c0_28] : memref<1x32x128xbf16, #tpu.memory_space<vmem>>, vector<1x32x128xbf16>
    %58 = vector.shape_cast %57 : vector<1x32x128xbf16> to vector<32x128xbf16>
    %cst_29 = arith.constant dense<0.000000e+00> : vector<16x128xf32>
    %59 = tpu.matmul %56, %58, %cst_29 {dimension_numbers = #tpu.dot_dimension_numbers<[1], [0], [0], [1], [0, 0, 1, 1], [], []>} : vector<16x32xbf16>, vector<32x128xbf16>, vector<16x128xf32> -> vector<16x128xf32>
    %c0_30 = arith.constant 0 : index
    %c0_31 = arith.constant 0 : index
    %c0_32 = arith.constant 0 : index
    %60 = vector.load %arg11[%c0_30, %c0_31, %c0_32] : memref<1x1x128xf32, #tpu.memory_space<vmem>>, vector<1x1x128xf32>
    %61 = vector.shape_cast %60 : vector<1x1x128xf32> to vector<128xf32>
    %62 = vector.shape_cast %61 : vector<128xf32> to vector<1x128xf32>
    %63 = vector.broadcast %62 : vector<1x128xf32> to vector<16x128xf32>
    %64 = arith.addf %59, %63 : vector<16x128xf32>
    %65 = vector.extract_strided_slice %64 {offsets = [0, 0], sizes = [16, 64], strides = [1, 1]} : vector<16x128xf32> to vector<16x64xf32>
    %66 = vector.extract_strided_slice %64 {offsets = [0, 64], sizes = [16, 64], strides = [1, 1]} : vector<16x128xf32> to vector<16x64xf32>
    %cst_33 = arith.constant 1.000000e+00 : f32
    %67 = vector.broadcast %cst_33 : f32 to vector<16x64xf32>
    %68 = arith.addf %67, %66 : vector<16x64xf32>
    %69 = arith.mulf %53, %68 : vector<16x64xf32>
    %70 = arith.addf %69, %65 : vector<16x64xf32>
    %c0_34 = arith.constant 0 : index
    %c0_35 = arith.constant 0 : index
    %c0_36 = arith.constant 0 : index
    %71 = vector.load %arg12[%c0_34, %c0_35, %c0_36] : memref<1x1x64xf32, #tpu.memory_space<vmem>>, vector<1x1x64xf32>
    %72 = vector.shape_cast %71 : vector<1x1x64xf32> to vector<64xf32>
    %c0_37 = arith.constant 0 : index
    %c0_38 = arith.constant 0 : index
    %c0_39 = arith.constant 0 : index
    %73 = vector.load %arg13[%c0_37, %c0_38, %c0_39] : memref<1x1x64xf32, #tpu.memory_space<vmem>>, vector<1x1x64xf32>
    %74 = vector.shape_cast %73 : vector<1x1x64xf32> to vector<64xf32>
    %cst_40 = arith.constant dense<0.000000e+00> : vector<16xf32>
    %75 = vector.multi_reduction <add>, %70, %cst_40 [1] : vector<16x64xf32> to vector<16xf32>
    %76 = vector.shape_cast %75 : vector<16xf32> to vector<16x1xf32>
    %cst_41 = arith.constant 6.400000e+01 : f32
    %77 = vector.broadcast %cst_41 : f32 to vector<16x1xf32>
    %78 = arith.divf %76, %77 : vector<16x1xf32>
    %79 = vector.broadcast %78 : vector<16x1xf32> to vector<16x64xf32>
    %80 = arith.subf %70, %79 : vector<16x64xf32>
    %81 = arith.mulf %80, %80 : vector<16x64xf32>
    %cst_42 = arith.constant dense<0.000000e+00> : vector<16xf32>
    %82 = vector.multi_reduction <add>, %81, %cst_42 [1] : vector<16x64xf32> to vector<16xf32>
    %83 = vector.shape_cast %82 : vector<16xf32> to vector<16x1xf32>
    %cst_43 = arith.constant 6.400000e+01 : f32
    %84 = vector.broadcast %cst_43 : f32 to vector<16x1xf32>
    %85 = arith.divf %83, %84 : vector<16x1xf32>
    %86 = vector.broadcast %78 : vector<16x1xf32> to vector<16x64xf32>
    %87 = arith.subf %70, %86 : vector<16x64xf32>
    %cst_44 = arith.constant 9.99999974E-6 : f32
    %88 = vector.broadcast %cst_44 : f32 to vector<16x1xf32>
    %89 = arith.addf %85, %88 : vector<16x1xf32>
    %90 = math.rsqrt %89 : vector<16x1xf32>
    %91 = vector.broadcast %90 : vector<16x1xf32> to vector<16x64xf32>
    %92 = arith.mulf %87, %91 : vector<16x64xf32>
    %93 = vector.shape_cast %72 : vector<64xf32> to vector<1x64xf32>
    %94 = vector.broadcast %93 : vector<1x64xf32> to vector<16x64xf32>
    %95 = arith.mulf %92, %94 : vector<16x64xf32>
    %96 = vector.shape_cast %74 : vector<64xf32> to vector<1x64xf32>
    %97 = vector.broadcast %96 : vector<1x64xf32> to vector<16x64xf32>
    %98 = arith.addf %95, %97 : vector<16x64xf32>
    %cst_45 = arith.constant 5.000000e-01 : f32
    %99 = vector.broadcast %cst_45 : f32 to vector<16x64xf32>
    %100 = arith.mulf %99, %98 : vector<16x64xf32>
    %cst_46 = arith.constant 4.471500e-02 : f32
    %101 = vector.broadcast %cst_46 : f32 to vector<16x64xf32>
    %102 = arith.mulf %101, %98 : vector<16x64xf32>
    %103 = arith.mulf %102, %98 : vector<16x64xf32>
    %104 = arith.mulf %103, %98 : vector<16x64xf32>
    %105 = arith.addf %98, %104 : vector<16x64xf32>
    %cst_47 = arith.constant 0.797884583 : f32
    %106 = vector.broadcast %cst_47 : f32 to vector<16x64xf32>
    %107 = arith.mulf %106, %105 : vector<16x64xf32>
    %108 = math.tanh %107 : vector<16x64xf32>
    %cst_48 = arith.constant 1.000000e+00 : f32
    %109 = vector.broadcast %cst_48 : f32 to vector<16x64xf32>
    %110 = arith.addf %109, %108 : vector<16x64xf32>
    %111 = arith.mulf %100, %110 : vector<16x64xf32>
    %c0_49 = arith.constant 0 : index
    %c0_50 = arith.constant 0 : index
    %c0_51 = arith.constant 0 : index
    %112 = vector.load %arg5[%c0_49, %c0_50, %c0_51] : memref<1x16x1xf32, #tpu.memory_space<vmem>>, vector<1x16x1xf32>
    %113 = vector.shape_cast %112 : vector<1x16x1xf32> to vector<16x1xf32>
    %114 = vector.broadcast %113 : vector<16x1xf32> to vector<16x64xf32>
    %115 = arith.mulf %111, %114 : vector<16x64xf32>
    %c8 = arith.constant 8 : index
    %c0_52 = arith.constant 0 : index
    %116 = vector.load %arg26[%c8, %c0_52] : memref<32x64xf32, #tpu.memory_space<vmem>>, vector<16x64xf32>
    tpu.vector_store %arg26[%c8, %c0_52], %115 {strides = array<i32>} : memref<32x64xf32, #tpu.memory_space<vmem>>, vector<16x64xf32>,
    %117 = arith.index_cast %arg1 : i32 to index
    %c0_53 = arith.constant 0 : index
    %118 = memref.load %arg2[%117, %c0_53] : memref<2x5xi32, #tpu.memory_space<smem>>
    %119 = arith.index_cast %118 : i32 to index
    %c0_54 = arith.constant 0 : index
    %120 = vector.load %arg26[%119, %c0_54] : memref<32x64xf32, #tpu.memory_space<vmem>>, vector<16x64xf32>
    %121 = arith.index_cast %arg1 : i32 to index
    %c1 = arith.constant 1 : index
    %122 = memref.load %arg2[%121, %c1] : memref<2x5xi32, #tpu.memory_space<smem>>
    %123 = arith.index_cast %122 : i32 to index
    %c0_55 = arith.constant 0 : index
    %124 = vector.load %arg26[%123, %c0_55] : memref<32x64xf32, #tpu.memory_space<vmem>>, vector<16x64xf32>
    %125 = arith.index_cast %arg1 : i32 to index
    %c2 = arith.constant 2 : index
    %126 = memref.load %arg2[%125, %c2] : memref<2x5xi32, #tpu.memory_space<smem>>
    %127 = arith.index_cast %126 : i32 to index
    %c0_56 = arith.constant 0 : index
    %128 = vector.load %arg26[%127, %c0_56] : memref<32x64xf32, #tpu.memory_space<vmem>>, vector<16x64xf32>
    %129 = arith.index_cast %arg1 : i32 to index
    %c3 = arith.constant 3 : index
    %130 = memref.load %arg2[%129, %c3] : memref<2x5xi32, #tpu.memory_space<smem>>
    %131 = arith.index_cast %130 : i32 to index
    %c0_57 = arith.constant 0 : index
    %132 = vector.load %arg26[%131, %c0_57] : memref<32x64xf32, #tpu.memory_space<vmem>>, vector<16x64xf32>
    %133 = arith.index_cast %arg1 : i32 to index
    %c4 = arith.constant 4 : index
    %134 = memref.load %arg2[%133, %c4] : memref<2x5xi32, #tpu.memory_space<smem>>
    %135 = arith.index_cast %134 : i32 to index
    %c0_58 = arith.constant 0 : index
    %136 = vector.load %arg26[%135, %c0_58] : memref<32x64xf32, #tpu.memory_space<vmem>>, vector<16x64xf32>
    %137 = tpu.concatenate %120, %124, %128, %132, %136 in 1 : vector<16x64xf32>, vector<16x64xf32>, vector<16x64xf32>, vector<16x64xf32>, vector<16x64xf32> -> vector<16x320xf32>
    %138 = arith.truncf %137 : vector<16x320xf32> to vector<16x320xbf16>
    %c0_59 = arith.constant 0 : index
    %c0_60 = arith.constant 0 : index
    %c0_61 = arith.constant 0 : index
    %139 = vector.load %arg14[%c0_59, %c0_60, %c0_61] : memref<1x320x64xbf16, #tpu.memory_space<vmem>>, vector<1x320x64xbf16>
    %140 = vector.shape_cast %139 : vector<1x320x64xbf16> to vector<320x64xbf16>
    %cst_62 = arith.constant dense<0.000000e+00> : vector<16x64xf32>
    %141 = tpu.matmul %138, %140, %cst_62 {dimension_numbers = #tpu.dot_dimension_numbers<[1], [0], [0], [1], [0, 0, 1, 1], [], []>} : vector<16x320xbf16>, vector<320x64xbf16>, vector<16x64xf32> -> vector<16x64xf32>
    %c0_63 = arith.constant 0 : index
    %c0_64 = arith.constant 0 : index
    %c0_65 = arith.constant 0 : index
    %142 = vector.load %arg15[%c0_63, %c0_64, %c0_65] : memref<1x1x64xf32, #tpu.memory_space<vmem>>, vector<1x1x64xf32>
    %143 = vector.shape_cast %142 : vector<1x1x64xf32> to vector<64xf32>
    %144 = vector.shape_cast %143 : vector<64xf32> to vector<1x64xf32>
    %145 = vector.broadcast %144 : vector<1x64xf32> to vector<16x64xf32>
    %146 = arith.addf %141, %145 : vector<16x64xf32>
    %c0_66 = arith.constant 0 : index
    %c0_67 = arith.constant 0 : index
    %c0_68 = arith.constant 0 : index
    %147 = vector.load %arg16[%c0_66, %c0_67, %c0_68] : memref<1x1x64xf32, #tpu.memory_space<vmem>>, vector<1x1x64xf32>
    %148 = vector.shape_cast %147 : vector<1x1x64xf32> to vector<64xf32>
    %c0_69 = arith.constant 0 : index
    %c0_70 = arith.constant 0 : index
    %c0_71 = arith.constant 0 : index
    %149 = vector.load %arg17[%c0_69, %c0_70, %c0_71] : memref<1x1x64xf32, #tpu.memory_space<vmem>>, vector<1x1x64xf32>
    %150 = vector.shape_cast %149 : vector<1x1x64xf32> to vector<64xf32>
    %cst_72 = arith.constant dense<0.000000e+00> : vector<16xf32>
    %151 = vector.multi_reduction <add>, %146, %cst_72 [1] : vector<16x64xf32> to vector<16xf32>
    %152 = vector.shape_cast %151 : vector<16xf32> to vector<16x1xf32>
    %cst_73 = arith.constant 6.400000e+01 : f32
    %153 = vector.broadcast %cst_73 : f32 to vector<16x1xf32>
    %154 = arith.divf %152, %153 : vector<16x1xf32>
    %155 = vector.broadcast %154 : vector<16x1xf32> to vector<16x64xf32>
    %156 = arith.subf %146, %155 : vector<16x64xf32>
    %157 = arith.mulf %156, %156 : vector<16x64xf32>
    %cst_74 = arith.constant dense<0.000000e+00> : vector<16xf32>
    %158 = vector.multi_reduction <add>, %157, %cst_74 [1] : vector<16x64xf32> to vector<16xf32>
    %159 = vector.shape_cast %158 : vector<16xf32> to vector<16x1xf32>
    %cst_75 = arith.constant 6.400000e+01 : f32
    %160 = vector.broadcast %cst_75 : f32 to vector<16x1xf32>
    %161 = arith.divf %159, %160 : vector<16x1xf32>
    %162 = vector.broadcast %154 : vector<16x1xf32> to vector<16x64xf32>
    %163 = arith.subf %146, %162 : vector<16x64xf32>
    %cst_76 = arith.constant 9.99999974E-6 : f32
    %164 = vector.broadcast %cst_76 : f32 to vector<16x1xf32>
    %165 = arith.addf %161, %164 : vector<16x1xf32>
    %166 = math.rsqrt %165 : vector<16x1xf32>
    %167 = vector.broadcast %166 : vector<16x1xf32> to vector<16x64xf32>
    %168 = arith.mulf %163, %167 : vector<16x64xf32>
    %169 = vector.shape_cast %148 : vector<64xf32> to vector<1x64xf32>
    %170 = vector.broadcast %169 : vector<1x64xf32> to vector<16x64xf32>
    %171 = arith.mulf %168, %170 : vector<16x64xf32>
    %172 = vector.shape_cast %150 : vector<64xf32> to vector<1x64xf32>
    %173 = vector.broadcast %172 : vector<1x64xf32> to vector<16x64xf32>
    %174 = arith.addf %171, %173 : vector<16x64xf32>
    %cst_77 = arith.constant 5.000000e-01 : f32
    %175 = vector.broadcast %cst_77 : f32 to vector<16x64xf32>
    %176 = arith.mulf %175, %174 : vector<16x64xf32>
    %cst_78 = arith.constant 4.471500e-02 : f32
    %177 = vector.broadcast %cst_78 : f32 to vector<16x64xf32>
    %178 = arith.mulf %177, %174 : vector<16x64xf32>
    %179 = arith.mulf %178, %174 : vector<16x64xf32>
    %180 = arith.mulf %179, %174 : vector<16x64xf32>
    %181 = arith.addf %174, %180 : vector<16x64xf32>
    %cst_79 = arith.constant 0.797884583 : f32
    %182 = vector.broadcast %cst_79 : f32 to vector<16x64xf32>
    %183 = arith.mulf %182, %181 : vector<16x64xf32>
    %184 = math.tanh %183 : vector<16x64xf32>
    %cst_80 = arith.constant 1.000000e+00 : f32
    %185 = vector.broadcast %cst_80 : f32 to vector<16x64xf32>
    %186 = arith.addf %185, %184 : vector<16x64xf32>
    %187 = arith.mulf %176, %186 : vector<16x64xf32>
    %188 = arith.truncf %187 : vector<16x64xf32> to vector<16x64xbf16>
    %c0_81 = arith.constant 0 : index
    %c0_82 = arith.constant 0 : index
    %c0_83 = arith.constant 0 : index
    %189 = vector.load %arg18[%c0_81, %c0_82, %c0_83] : memref<1x64x128xbf16, #tpu.memory_space<vmem>>, vector<1x64x128xbf16>
    %190 = vector.shape_cast %189 : vector<1x64x128xbf16> to vector<64x128xbf16>
    %cst_84 = arith.constant dense<0.000000e+00> : vector<16x128xf32>
    %191 = tpu.matmul %188, %190, %cst_84 {dimension_numbers = #tpu.dot_dimension_numbers<[1], [0], [0], [1], [0, 0, 1, 1], [], []>} : vector<16x64xbf16>, vector<64x128xbf16>, vector<16x128xf32> -> vector<16x128xf32>
    %c0_85 = arith.constant 0 : index
    %c0_86 = arith.constant 0 : index
    %c0_87 = arith.constant 0 : index
    %192 = vector.load %arg19[%c0_85, %c0_86, %c0_87] : memref<1x1x128xf32, #tpu.memory_space<vmem>>, vector<1x1x128xf32>
    %193 = vector.shape_cast %192 : vector<1x1x128xf32> to vector<128xf32>
    %194 = vector.shape_cast %193 : vector<128xf32> to vector<1x128xf32>
    %195 = vector.broadcast %194 : vector<1x128xf32> to vector<16x128xf32>
    %196 = arith.addf %191, %195 : vector<16x128xf32>
    %197 = arith.addf %3, %196 : vector<16x128xf32>
    %c0_88 = arith.constant 0 : index
    %c0_89 = arith.constant 0 : index
    %198 = vector.load %arg25[%c0_88, %c0_89] : memref<16x128xf32, #tpu.memory_space<vmem>>, vector<16x128xf32>
    tpu.vector_store %arg25[%c0_88, %c0_89], %197 {strides = array<i32>} : memref<16x128xf32, #tpu.memory_space<vmem>>, vector<16x128xf32>,
    %c1_i32 = arith.constant 1 : i32
    %199 = arith.cmpi eq, %arg1, %c1_i32 : i32
    %200 = arith.extui %199 : i1 to i32
    %c0_i32_90 = arith.constant 0 : i32
    %201 = arith.cmpi ne, %200, %c0_i32_90 : i32
    scf.if %201 {
      %c0_91 = arith.constant 0 : index
      %c0_92 = arith.constant 0 : index
      %202 = vector.load %arg20[%c0_91, %c0_92] : memref<1x128xf32, #tpu.memory_space<vmem>>, vector<1x128xf32>
      %203 = vector.shape_cast %202 : vector<1x128xf32> to vector<128xf32>
      %c0_93 = arith.constant 0 : index
      %c0_94 = arith.constant 0 : index
      %204 = vector.load %arg21[%c0_93, %c0_94] : memref<1x128xf32, #tpu.memory_space<vmem>>, vector<1x128xf32>
      %205 = vector.shape_cast %204 : vector<1x128xf32> to vector<128xf32>
      %cst_95 = arith.constant dense<0.000000e+00> : vector<16xf32>
      %206 = vector.multi_reduction <add>, %197, %cst_95 [1] : vector<16x128xf32> to vector<16xf32>
      %207 = vector.shape_cast %206 : vector<16xf32> to vector<16x1xf32>
      %cst_96 = arith.constant 1.280000e+02 : f32
      %208 = vector.broadcast %cst_96 : f32 to vector<16x1xf32>
      %209 = arith.divf %207, %208 : vector<16x1xf32>
      %210 = vector.broadcast %209 : vector<16x1xf32> to vector<16x128xf32>
      %211 = arith.subf %197, %210 : vector<16x128xf32>
      %212 = arith.mulf %211, %211 : vector<16x128xf32>
      %cst_97 = arith.constant dense<0.000000e+00> : vector<16xf32>
      %213 = vector.multi_reduction <add>, %212, %cst_97 [1] : vector<16x128xf32> to vector<16xf32>
      %214 = vector.shape_cast %213 : vector<16xf32> to vector<16x1xf32>
      %cst_98 = arith.constant 1.280000e+02 : f32
      %215 = vector.broadcast %cst_98 : f32 to vector<16x1xf32>
      %216 = arith.divf %214, %215 : vector<16x1xf32>
      %217 = vector.broadcast %209 : vector<16x1xf32> to vector<16x128xf32>
      %218 = arith.subf %197, %217 : vector<16x128xf32>
      %cst_99 = arith.constant 9.99999974E-6 : f32
      %219 = vector.broadcast %cst_99 : f32 to vector<16x1xf32>
      %220 = arith.addf %216, %219 : vector<16x1xf32>
      %221 = math.rsqrt %220 : vector<16x1xf32>
      %222 = vector.broadcast %221 : vector<16x1xf32> to vector<16x128xf32>
      %223 = arith.mulf %218, %222 : vector<16x128xf32>
      %224 = vector.shape_cast %203 : vector<128xf32> to vector<1x128xf32>
      %225 = vector.broadcast %224 : vector<1x128xf32> to vector<16x128xf32>
      %226 = arith.mulf %223, %225 : vector<16x128xf32>
      %227 = vector.shape_cast %205 : vector<128xf32> to vector<1x128xf32>
      %228 = vector.broadcast %227 : vector<1x128xf32> to vector<16x128xf32>
      %229 = arith.addf %226, %228 : vector<16x128xf32>
      %230 = arith.truncf %229 : vector<16x128xf32> to vector<16x128xbf16>
      %c0_100 = arith.constant 0 : index
      %c0_101 = arith.constant 0 : index
      %231 = vector.load %arg22[%c0_100, %c0_101] : memref<128x128xbf16, #tpu.memory_space<vmem>>, vector<128x128xbf16>
      %cst_102 = arith.constant dense<0.000000e+00> : vector<16x128xf32>
      %232 = tpu.matmul %230, %231, %cst_102 {dimension_numbers = #tpu.dot_dimension_numbers<[1], [0], [0], [1], [0, 0, 1, 1], [], []>} : vector<16x128xbf16>, vector<128x128xbf16>, vector<16x128xf32> -> vector<16x128xf32>
      %c0_103 = arith.constant 0 : index
      %c0_104 = arith.constant 0 : index
      %233 = vector.load %arg23[%c0_103, %c0_104] : memref<1x128xf32, #tpu.memory_space<vmem>>, vector<1x128xf32>
      %234 = vector.shape_cast %233 : vector<1x128xf32> to vector<128xf32>
      %235 = vector.shape_cast %234 : vector<128xf32> to vector<1x128xf32>
      %236 = vector.broadcast %235 : vector<1x128xf32> to vector<16x128xf32>
      %237 = arith.addf %232, %236 : vector<16x128xf32>
      %c0_105 = arith.constant 0 : index
      %c0_106 = arith.constant 0 : index
      %c0_107 = arith.constant 0 : index
      %238 = vector.load %arg24[%c0_105, %c0_106, %c0_107] : memref<1x16x128xf32, #tpu.memory_space<vmem>>, vector<1x16x128xf32>
      %239 = vector.shape_cast %238 : vector<1x16x128xf32> to vector<16x128xf32>
      %240 = vector.shape_cast %237 : vector<16x128xf32> to vector<1x16x128xf32>
      tpu.vector_store %arg24[%c0_105, %c0_106, %c0_107], %240 {strides = array<i32>} : memref<1x16x128xf32, #tpu.memory_space<vmem>>, vector<1x16x128xf32>,
    } else {
    }
    return
  }
  func.func @transform_0(%arg0: i32, %arg1: i32, %arg2: memref<2x5xi32, #tpu.memory_space<smem>>) -> (i32, i32, i32) {
    %c0_i32 = arith.constant 0 : i32
    %c0_i32_0 = arith.constant 0 : i32
    %c0_i32_1 = arith.constant 0 : i32
    return %arg0, %c0_i32, %c0_i32_0 : i32, i32, i32
  }
  func.func @transform_1(%arg0: i32, %arg1: i32, %arg2: memref<2x5xi32, #tpu.memory_space<smem>>) -> (i32, i32, i32) {
    %c0_i32 = arith.constant 0 : i32
    %c0_i32_0 = arith.constant 0 : i32
    %c0_i32_1 = arith.constant 0 : i32
    return %arg0, %c0_i32, %c0_i32_0 : i32, i32, i32
  }
  func.func @transform_2(%arg0: i32, %arg1: i32, %arg2: memref<2x5xi32, #tpu.memory_space<smem>>) -> (i32, i32, i32) {
    %c0_i32 = arith.constant 0 : i32
    %c0_i32_0 = arith.constant 0 : i32
    %c0_i32_1 = arith.constant 0 : i32
    return %arg0, %c0_i32, %c0_i32_0 : i32, i32, i32
  }
  func.func @transform_3(%arg0: i32, %arg1: i32, %arg2: memref<2x5xi32, #tpu.memory_space<smem>>) -> (i32, i32, i32) {
    %c0_i32 = arith.constant 0 : i32
    %c0_i32_0 = arith.constant 0 : i32
    %c0_i32_1 = arith.constant 0 : i32
    return %arg1, %c0_i32, %c0_i32_0 : i32, i32, i32
  }
  func.func @transform_4(%arg0: i32, %arg1: i32, %arg2: memref<2x5xi32, #tpu.memory_space<smem>>) -> (i32, i32, i32) {
    %c0_i32 = arith.constant 0 : i32
    %c0_i32_0 = arith.constant 0 : i32
    %c0_i32_1 = arith.constant 0 : i32
    return %arg1, %c0_i32, %c0_i32_0 : i32, i32, i32
  }
  func.func @transform_5(%arg0: i32, %arg1: i32, %arg2: memref<2x5xi32, #tpu.memory_space<smem>>) -> (i32, i32, i32) {
    %c0_i32 = arith.constant 0 : i32
    %c0_i32_0 = arith.constant 0 : i32
    %c0_i32_1 = arith.constant 0 : i32
    return %arg1, %c0_i32, %c0_i32_0 : i32, i32, i32
  }
  func.func @transform_6(%arg0: i32, %arg1: i32, %arg2: memref<2x5xi32, #tpu.memory_space<smem>>) -> (i32, i32, i32) {
    %c0_i32 = arith.constant 0 : i32
    %c0_i32_0 = arith.constant 0 : i32
    %c0_i32_1 = arith.constant 0 : i32
    return %arg1, %c0_i32, %c0_i32_0 : i32, i32, i32
  }
  func.func @transform_7(%arg0: i32, %arg1: i32, %arg2: memref<2x5xi32, #tpu.memory_space<smem>>) -> (i32, i32, i32) {
    %c0_i32 = arith.constant 0 : i32
    %c0_i32_0 = arith.constant 0 : i32
    %c0_i32_1 = arith.constant 0 : i32
    return %arg1, %c0_i32, %c0_i32_0 : i32, i32, i32
  }
  func.func @transform_8(%arg0: i32, %arg1: i32, %arg2: memref<2x5xi32, #tpu.memory_space<smem>>) -> (i32, i32, i32) {
    %c0_i32 = arith.constant 0 : i32
    %c0_i32_0 = arith.constant 0 : i32
    %c0_i32_1 = arith.constant 0 : i32
    return %arg1, %c0_i32, %c0_i32_0 : i32, i32, i32
  }
  func.func @transform_9(%arg0: i32, %arg1: i32, %arg2: memref<2x5xi32, #tpu.memory_space<smem>>) -> (i32, i32, i32) {
    %c0_i32 = arith.constant 0 : i32
    %c0_i32_0 = arith.constant 0 : i32
    %c0_i32_1 = arith.constant 0 : i32
    return %arg1, %c0_i32, %c0_i32_0 : i32, i32, i32
  }
  func.func @transform_10(%arg0: i32, %arg1: i32, %arg2: memref<2x5xi32, #tpu.memory_space<smem>>) -> (i32, i32, i32) {
    %c0_i32 = arith.constant 0 : i32
    %c0_i32_0 = arith.constant 0 : i32
    %c0_i32_1 = arith.constant 0 : i32
    return %arg1, %c0_i32, %c0_i32_0 : i32, i32, i32
  }
  func.func @transform_11(%arg0: i32, %arg1: i32, %arg2: memref<2x5xi32, #tpu.memory_space<smem>>) -> (i32, i32, i32) {
    %c0_i32 = arith.constant 0 : i32
    %c0_i32_0 = arith.constant 0 : i32
    %c0_i32_1 = arith.constant 0 : i32
    return %arg1, %c0_i32, %c0_i32_0 : i32, i32, i32
  }
  func.func @transform_12(%arg0: i32, %arg1: i32, %arg2: memref<2x5xi32, #tpu.memory_space<smem>>) -> (i32, i32, i32) {
    %c0_i32 = arith.constant 0 : i32
    %c0_i32_0 = arith.constant 0 : i32
    %c0_i32_1 = arith.constant 0 : i32
    return %arg1, %c0_i32, %c0_i32_0 : i32, i32, i32
  }
  func.func @transform_13(%arg0: i32, %arg1: i32, %arg2: memref<2x5xi32, #tpu.memory_space<smem>>) -> (i32, i32, i32) {
    %c0_i32 = arith.constant 0 : i32
    %c0_i32_0 = arith.constant 0 : i32
    %c0_i32_1 = arith.constant 0 : i32
    return %arg1, %c0_i32, %c0_i32_0 : i32, i32, i32
  }
  func.func @transform_14(%arg0: i32, %arg1: i32, %arg2: memref<2x5xi32, #tpu.memory_space<smem>>) -> (i32, i32, i32) {
    %c0_i32 = arith.constant 0 : i32
    %c0_i32_0 = arith.constant 0 : i32
    %c0_i32_1 = arith.constant 0 : i32
    return %arg1, %c0_i32, %c0_i32_0 : i32, i32, i32
  }
  func.func @transform_15(%arg0: i32, %arg1: i32, %arg2: memref<2x5xi32, #tpu.memory_space<smem>>) -> (i32, i32, i32) {
    %c0_i32 = arith.constant 0 : i32
    %c0_i32_0 = arith.constant 0 : i32
    %c0_i32_1 = arith.constant 0 : i32
    return %arg1, %c0_i32, %c0_i32_0 : i32, i32, i32
  }
  func.func @transform_16(%arg0: i32, %arg1: i32, %arg2: memref<2x5xi32, #tpu.memory_space<smem>>) -> (i32, i32, i32) {
    %c0_i32 = arith.constant 0 : i32
    %c0_i32_0 = arith.constant 0 : i32
    %c0_i32_1 = arith.constant 0 : i32
    return %arg1, %c0_i32, %c0_i32_0 : i32, i32, i32
  }
  func.func @transform_17(%arg0: i32, %arg1: i32, %arg2: memref<2x5xi32, #tpu.memory_space<smem>>) -> (i32, i32) {
    %c0_i32 = arith.constant 0 : i32
    %c0_i32_0 = arith.constant 0 : i32
    %c0_i32_1 = arith.constant 0 : i32
    return %c0_i32, %c0_i32_0 : i32, i32
  }
  func.func @transform_18(%arg0: i32, %arg1: i32, %arg2: memref<2x5xi32, #tpu.memory_space<smem>>) -> (i32, i32) {
    %c0_i32 = arith.constant 0 : i32
    %c0_i32_0 = arith.constant 0 : i32
    %c0_i32_1 = arith.constant 0 : i32
    return %c0_i32, %c0_i32_0 : i32, i32
  }
  func.func @transform_19(%arg0: i32, %arg1: i32, %arg2: memref<2x5xi32, #tpu.memory_space<smem>>) -> (i32, i32) {
    %c0_i32 = arith.constant 0 : i32
    %c0_i32_0 = arith.constant 0 : i32
    %c0_i32_1 = arith.constant 0 : i32
    return %c0_i32, %c0_i32_0 : i32, i32
  }
  func.func @transform_20(%arg0: i32, %arg1: i32, %arg2: memref<2x5xi32, #tpu.memory_space<smem>>) -> (i32, i32) {
    %c0_i32 = arith.constant 0 : i32
    %c0_i32_0 = arith.constant 0 : i32
    %c0_i32_1 = arith.constant 0 : i32
    return %c0_i32, %c0_i32_0 : i32, i32
  }
  func.func @transform_21(%arg0: i32, %arg1: i32, %arg2: memref<2x5xi32, #tpu.memory_space<smem>>) -> (i32, i32, i32) {
    %c0_i32 = arith.constant 0 : i32
    %c0_i32_0 = arith.constant 0 : i32
    %c0_i32_1 = arith.constant 0 : i32
    return %arg0, %c0_i32, %c0_i32_0 : i32, i32, i32
  }
}

</mosaic_0001>

<llo_original>
// kernel: tpu_custom_call.1
$region0: #{tpu_custom_call.1}
  #allocation0 [shape = 'u32[]', space=smem, size = 0x4, offset = 0x4, fixed_abs, tag = 'smem constant byte address 0x4 - core index']
  #allocation1 [shape = 'u32[144,128]{1,0:T(1,128)}', space=vmem, size = 0x12000, scoped, tag = 'internal scratch']
  #allocation2 [shape = 'f32[16,128]{1,0:T(8,128)}', space=vmem, size = 0x2000, scoped, tag = 'scratch operand']
  #allocation3 [shape = 'f32[32,64]{1,0:T(8,128)}', space=vmem, size = 0x4000, scoped, tag = 'scratch operand']
  #allocation4 [shape = 's32[1]{0}', space=sflag, size = 0x4, scoped, tag = 'scoped memory for tpu_custom_call.1']
  #allocation5 [shape = 'u8[1024]{0}', space=smem, size = 0x400, scoped, tag = 'prefetched SMEM operand 0']
  %s0 = inlined_call_operand.vmem [shape: s32[2,5], index: 0, kind: input, shape index: {}]
  %s1 = inlined_call_operand.vmem [shape: f32[2,16,128], index: 1, kind: input, shape index: {}]
  %s2 = inlined_call_operand.vmem [shape: f32[2,16,32], index: 2, kind: input, shape index: {}]
  %s3 = inlined_call_operand.vmem [shape: f32[2,16,1], index: 3, kind: input, shape index: {}]
  %s4 = inlined_call_operand.vmem [shape: f32[2,1,128], index: 4, kind: input, shape index: {}]
  %s5 = inlined_call_operand.vmem [shape: f32[2,1,128], index: 5, kind: input, shape index: {}]
  %s6 = inlined_call_operand.vmem [shape: bf16[2,128,64], index: 6, kind: input, shape index: {}]
  %s7 = inlined_call_operand.vmem [shape: f32[2,1,64], index: 7, kind: input, shape index: {}]
  %s8 = inlined_call_operand.vmem [shape: bf16[2,32,128], index: 8, kind: input, shape index: {}]
  %s9 = inlined_call_operand.vmem [shape: f32[2,1,128], index: 9, kind: input, shape index: {}]
  %s10 = inlined_call_operand.vmem [shape: f32[2,1,64], index: 10, kind: input, shape index: {}]
  %s11 = inlined_call_operand.vmem [shape: f32[2,1,64], index: 11, kind: input, shape index: {}]
  %s12 = inlined_call_operand.vmem [shape: bf16[2,320,64], index: 12, kind: input, shape index: {}]
  %s13 = inlined_call_operand.vmem [shape: f32[2,1,64], index: 13, kind: input, shape index: {}]
  %s14 = inlined_call_operand.vmem [shape: f32[2,1,64], index: 14, kind: input, shape index: {}]
  %s15 = inlined_call_operand.vmem [shape: f32[2,1,64], index: 15, kind: input, shape index: {}]
  %s16 = inlined_call_operand.vmem [shape: bf16[2,64,128], index: 16, kind: input, shape index: {}]
  %s17 = inlined_call_operand.vmem [shape: f32[2,1,128], index: 17, kind: input, shape index: {}]
  %s18 = inlined_call_operand.vmem [shape: f32[1,128], index: 18, kind: input, shape index: {}]
  %s19 = inlined_call_operand.vmem [shape: f32[1,128], index: 19, kind: input, shape index: {}]
  %s20 = inlined_call_operand.vmem [shape: bf16[128,128], index: 20, kind: input, shape index: {}]
  %s21 = inlined_call_operand.vmem [shape: f32[1,128], index: 21, kind: input, shape index: {}]
  %s22 = inlined_call_operand.hbm [shape: f32[2,16,128], index: 22, kind: output, shape index: {}]
  %s23 = sld [smem:[#allocation0]]
  $region125: #{tpu_custom_call.1} parent=0
    _
  %s25 = ssub.s32 1, %s23
  %s26 = scalar_select 0, %s25, %s23
  %s27 = sshll.u32 %s0, 4
  %s28 = int_to_ptr.vmem [resolvable:$true] %s27
  %30 = dma.vmem_to_smem %s28, 32, [#allocation5], [#allocation4]
  %31 = dma.done [#allocation4], 32
  %32 = sfence
  $region1: #{tpu_custom_call.1} parent=0
    #allocation6 [shape = 'u8[16384]{0}', space=vmem, size = 0x4000, scoped, tag = 'output window, operand 0']
    #allocation7 [shape = 's32[2]{0}', space=sflag, size = 0x8, scoped, tag = 'scoped memory for tpu_custom_call.1']
    %33 = vsyncpa [#allocation7], 0
    %s34 = scalar_lea.sflag [#allocation7], 1
    %35 = vsyncpa %s34, 0
    loop: start=0, step=1, limit=6
    $region2: #{tpu_custom_call.1} parent=1 // loop_pre_header
      _
    $region3: #{tpu_custom_call.1} parent=1 // loop_header
      %s37 = sphi 0, %s41
      %p38 = scmp.ge.s32.totalorder %s37, 6
      %s44 = sphi 0, %s56
      %s45 = sphi 0, %s52
      %s46 = sphi 0, %s44
      %s47 = sphi 0, %s45
      %s48 = sphi 0, %s46
      %s49 = sphi 0, %s47
      %s59 = sphi 0, %s61
      %s62 = sphi 0, %s59
      %s63 = sphi 0, %s62
      %s79 = sphi 0, %s63
      %s85 = sphi 0, %s87
      %s88 = sphi 0, %s85
      %s89 = sphi 0, %s88
      %s105 = sphi 0, %s89
      %s111 = sphi 0, %s113
      %s114 = sphi 0, %s111
      %s115 = sphi 0, %s114
      %s131 = sphi 0, %s115
      %s137 = sphi 0, %s139
      %s140 = sphi 0, %s137
      %s141 = sphi 0, %s140
      %s157 = sphi 0, %s141
      %s163 = sphi 0, %s165
      %s166 = sphi 0, %s163
      %s167 = sphi 0, %s166
      %s183 = sphi 0, %s167
      %s189 = sphi 0, %s191
      %s192 = sphi 0, %s189
      %s193 = sphi 0, %s192
      %s209 = sphi 0, %s193
      %s215 = sphi 0, %s217
      %s218 = sphi 0, %s215
      %s219 = sphi 0, %s218
      %s235 = sphi 0, %s219
      %s241 = sphi 0, %s243
      %s244 = sphi 0, %s241
      %s245 = sphi 0, %s244
      %s261 = sphi 0, %s245
      %s267 = sphi 0, %s269
      %s270 = sphi 0, %s267
      %s271 = sphi 0, %s270
      %s287 = sphi 0, %s271
      %s293 = sphi 0, %s295
      %s296 = sphi 0, %s293
      %s297 = sphi 0, %s296
      %s313 = sphi 0, %s297
      %s319 = sphi 0, %s321
      %s322 = sphi 0, %s319
      %s323 = sphi 0, %s322
      %s339 = sphi 0, %s323
      %s345 = sphi 0, %s347
      %s348 = sphi 0, %s345
      %s349 = sphi 0, %s348
      %s365 = sphi 0, %s349
      %s371 = sphi 0, %s373
      %s374 = sphi 0, %s371
      %s375 = sphi 0, %s374
      %s391 = sphi 0, %s375
      %s397 = sphi 0, %s399
      %s400 = sphi 0, %s397
      %s401 = sphi 0, %s400
      %s417 = sphi 0, %s401
      %s423 = sphi 0, %s425
      %s426 = sphi 0, %s423
      %s427 = sphi 0, %s426
      %s443 = sphi 0, %s427
      %s449 = sphi 0, %s451
      %s452 = sphi 0, %s449
      %s453 = sphi 0, %s452
      %s469 = sphi 0, %s453
      %s475 = sphi 0, %s477
      %s478 = sphi 0, %s475
      %s479 = sphi 0, %s478
      %s495 = sphi 0, %s479
      %s499 = sphi 0, %s499
      %s501 = sphi 0, %s499
      %s502 = sphi 0, %s501
      %s516 = sphi 0, %s502
      %s520 = sphi 0, %s520
      %s522 = sphi 0, %s520
      %s523 = sphi 0, %s522
      %s537 = sphi 0, %s523
      %s541 = sphi 0, %s541
      %s543 = sphi 0, %s541
      %s544 = sphi 0, %s543
      %s558 = sphi 0, %s544
      %s562 = sphi 0, %s562
      %s564 = sphi 0, %s562
      %s565 = sphi 0, %s564
      %s579 = sphi 0, %s565
      %s585 = sphi 0, %s587
      %s588 = sphi 0, %s585
      %s589 = sphi 0, %s588
      %s605 = sphi 0, %s589
    $region4: #{tpu_custom_call.1} parent=1 // loop_header_branch
      %40 = sbr.rel (%p38) target = $region8
    $region5: #{tpu_custom_call.1} parent=1 // loop_body
      %s42 = ssub.s32 %s37, 1
      %s43 = ssub.s32 %s37, 2
      %s50 = sadd.s32 1, %s45
      %p51 = scmp.ge.s32.totalorder %s50, 2
      %s52 = scalar_select %p51, 0, %s50
      %s53 = sadd.s32 1, %s44
      %s54 = scalar_select %p51, %s53, %s44
      %p55 = scmp.ge.s32.totalorder %s54, 2
      %s56 = scalar_select %p55, 0, %s54
      %s57 = ssub.s32 %s44, %s56
      %p58 = scmp.eq.s32.totalorder %s57, 0
      %s60 = sadd.s32 %s59, 1
      %s61 = scalar_select %p58, %s59, %s60
      %p64 = pneg %p58
      %p65 = scmp.eq.s32.totalorder %s37, 3
      %p66 = por %p64, %p65
      %p67 = scmp.ne.s32.totalorder %s59, %s62
      %p68 = scmp.eq.s32.totalorder %s37, 0
      %p69 = por %p67, %p68
      %p70 = scmp.ne.s32.totalorder %s59, %s62
      %p71 = scmp.eq.s32.totalorder %s42, 3
      %p72 = por %p70, %p71
      %p73 = scmp.ne.s32.totalorder %s62, %s63
      %p74 = scmp.eq.s32.totalorder %s42, 0
      %p75 = por %p73, %p74
      %p76 = scmp.ne.s32.totalorder %s62, %s63
      %p77 = scmp.eq.s32.totalorder %s43, 3
      %p78 = por %p76, %p77
      %p80 = scmp.ne.s32.totalorder %s63, %s79
      %p81 = scmp.eq.s32.totalorder %s43, 0
      %p82 = por %p80, %p81
      %s83 = ssub.s32 %s44, %s56
      %p84 = scmp.eq.s32.totalorder %s83, 0
      %s86 = sadd.s32 %s85, 1
      %s87 = scalar_select %p84, %s85, %s86
      %p90 = pneg %p84
      %p91 = scmp.eq.s32.totalorder %s37, 3
      %p92 = por %p90, %p91
      %p93 = scmp.ne.s32.totalorder %s85, %s88
      %p94 = scmp.eq.s32.totalorder %s37, 0
      %p95 = por %p93, %p94
      %p96 = scmp.ne.s32.totalorder %s85, %s88
      %p97 = scmp.eq.s32.totalorder %s42, 3
      %p98 = por %p96, %p97
      %p99 = scmp.ne.s32.totalorder %s88, %s89
      %p100 = scmp.eq.s32.totalorder %s42, 0
      %p101 = por %p99, %p100
      %p102 = scmp.ne.s32.totalorder %s88, %s89
      %p103 = scmp.eq.s32.totalorder %s43, 3
      %p104 = por %p102, %p103
      %p106 = scmp.ne.s32.totalorder %s89, %s105
      %p107 = scmp.eq.s32.totalorder %s43, 0
      %p108 = por %p106, %p107
      %s109 = ssub.s32 %s44, %s56
      %p110 = scmp.eq.s32.totalorder %s109, 0
      %s112 = sadd.s32 %s111, 1
      %s113 = scalar_select %p110, %s111, %s112
      %p116 = pneg %p110
      %p117 = scmp.eq.s32.totalorder %s37, 3
      %p118 = por %p116, %p117
      %p119 = scmp.ne.s32.totalorder %s111, %s114
      %p120 = scmp.eq.s32.totalorder %s37, 0
      %p121 = por %p119, %p120
      %p122 = scmp.ne.s32.totalorder %s111, %s114
      %p123 = scmp.eq.s32.totalorder %s42, 3
      %p124 = por %p122, %p123
      %p125 = scmp.ne.s32.totalorder %s114, %s115
      %p126 = scmp.eq.s32.totalorder %s42, 0
      %p127 = por %p125, %p126
      %p128 = scmp.ne.s32.totalorder %s114, %s115
      %p129 = scmp.eq.s32.totalorder %s43, 3
      %p130 = por %p128, %p129
      %p132 = scmp.ne.s32.totalorder %s115, %s131
      %p133 = scmp.eq.s32.totalorder %s43, 0
      %p134 = por %p132, %p133
      %s135 = ssub.s32 %s45, %s52
      %p136 = scmp.eq.s32.totalorder %s135, 0
      %s138 = sadd.s32 %s137, 1
      %s139 = scalar_select %p136, %s137, %s138
      %p142 = pneg %p136
      %p143 = scmp.eq.s32.totalorder %s37, 3
      %p144 = por %p142, %p143
      %p145 = scmp.ne.s32.totalorder %s137, %s140
      %p146 = scmp.eq.s32.totalorder %s37, 0
      %p147 = por %p145, %p146
      %p148 = scmp.ne.s32.totalorder %s137, %s140
      %p149 = scmp.eq.s32.totalorder %s42, 3
      %p150 = por %p148, %p149
      %p151 = scmp.ne.s32.totalorder %s140, %s141
      %p152 = scmp.eq.s32.totalorder %s42, 0
      %p153 = por %p151, %p152
      %p154 = scmp.ne.s32.totalorder %s140, %s141
      %p155 = scmp.eq.s32.totalorder %s43, 3
      %p156 = por %p154, %p155
      %p158 = scmp.ne.s32.totalorder %s141, %s157
      %p159 = scmp.eq.s32.totalorder %s43, 0
      %p160 = por %p158, %p159
      %s161 = ssub.s32 %s45, %s52
      %p162 = scmp.eq.s32.totalorder %s161, 0
      %s164 = sadd.s32 %s163, 1
      %s165 = scalar_select %p162, %s163, %s164
      %p168 = pneg %p162
      %p169 = scmp.eq.s32.totalorder %s37, 3
      %p170 = por %p168, %p169
      %p171 = scmp.ne.s32.totalorder %s163, %s166
      %p172 = scmp.eq.s32.totalorder %s37, 0
      %p173 = por %p171, %p172
      %p174 = scmp.ne.s32.totalorder %s163, %s166
      %p175 = scmp.eq.s32.totalorder %s42, 3
      %p176 = por %p174, %p175
      %p177 = scmp.ne.s32.totalorder %s166, %s167
      %p178 = scmp.eq.s32.totalorder %s42, 0
      %p179 = por %p177, %p178
      %p180 = scmp.ne.s32.totalorder %s166, %s167
      %p181 = scmp.eq.s32.totalorder %s43, 3
      %p182 = por %p180, %p181
      %p184 = scmp.ne.s32.totalorder %s167, %s183
      %p185 = scmp.eq.s32.totalorder %s43, 0
      %p186 = por %p184, %p185
      %s187 = ssub.s32 %s45, %s52
      %p188 = scmp.eq.s32.totalorder %s187, 0
      %s190 = sadd.s32 %s189, 1
      %s191 = scalar_select %p188, %s189, %s190
      %p194 = pneg %p188
      %p195 = scmp.eq.s32.totalorder %s37, 3
      %p196 = por %p194, %p195
      %p197 = scmp.ne.s32.totalorder %s189, %s192
      %p198 = scmp.eq.s32.totalorder %s37, 0
      %p199 = por %p197, %p198
      %p200 = scmp.ne.s32.totalorder %s189, %s192
      %p201 = scmp.eq.s32.totalorder %s42, 3
      %p202 = por %p200, %p201
      %p203 = scmp.ne.s32.totalorder %s192, %s193
      %p204 = scmp.eq.s32.totalorder %s42, 0
      %p205 = por %p203, %p204
      %p206 = scmp.ne.s32.totalorder %s192, %s193
      %p207 = scmp.eq.s32.totalorder %s43, 3
      %p208 = por %p206, %p207
      %p210 = scmp.ne.s32.totalorder %s193, %s209
      %p211 = scmp.eq.s32.totalorder %s43, 0
      %p212 = por %p210, %p211
      %s213 = ssub.s32 %s45, %s52
      %p214 = scmp.eq.s32.totalorder %s213, 0
      %s216 = sadd.s32 %s215, 1
      %s217 = scalar_select %p214, %s215, %s216
      %p220 = pneg %p214
      %p221 = scmp.eq.s32.totalorder %s37, 3
      %p222 = por %p220, %p221
      %p223 = scmp.ne.s32.totalorder %s215, %s218
      %p224 = scmp.eq.s32.totalorder %s37, 0
      %p225 = por %p223, %p224
      %p226 = scmp.ne.s32.totalorder %s215, %s218
      %p227 = scmp.eq.s32.totalorder %s42, 3
      %p228 = por %p226, %p227
      %p229 = scmp.ne.s32.totalorder %s218, %s219
      %p230 = scmp.eq.s32.totalorder %s42, 0
      %p231 = por %p229, %p230
      %p232 = scmp.ne.s32.totalorder %s218, %s219
      %p233 = scmp.eq.s32.totalorder %s43, 3
      %p234 = por %p232, %p233
      %p236 = scmp.ne.s32.totalorder %s219, %s235
      %p237 = scmp.eq.s32.totalorder %s43, 0
      %p238 = por %p236, %p237
      %s239 = ssub.s32 %s45, %s52
      %p240 = scmp.eq.s32.totalorder %s239, 0
      %s242 = sadd.s32 %s241, 1
      %s243 = scalar_select %p240, %s241, %s242
      %p246 = pneg %p240
      %p247 = scmp.eq.s32.totalorder %s37, 3
      %p248 = por %p246, %p247
      %p249 = scmp.ne.s32.totalorder %s241, %s244
      %p250 = scmp.eq.s32.totalorder %s37, 0
      %p251 = por %p249, %p250
      %p252 = scmp.ne.s32.totalorder %s241, %s244
      %p253 = scmp.eq.s32.totalorder %s42, 3
      %p254 = por %p252, %p253
      %p255 = scmp.ne.s32.totalorder %s244, %s245
      %p256 = scmp.eq.s32.totalorder %s42, 0
      %p257 = por %p255, %p256
      %p258 = scmp.ne.s32.totalorder %s244, %s245
      %p259 = scmp.eq.s32.totalorder %s43, 3
      %p260 = por %p258, %p259
      %p262 = scmp.ne.s32.totalorder %s245, %s261
      %p263 = scmp.eq.s32.totalorder %s43, 0
      %p264 = por %p262, %p263
      %s265 = ssub.s32 %s45, %s52
      %p266 = scmp.eq.s32.totalorder %s265, 0
      %s268 = sadd.s32 %s267, 1
      %s269 = scalar_select %p266, %s267, %s268
      %p272 = pneg %p266
      %p273 = scmp.eq.s32.totalorder %s37, 3
      %p274 = por %p272, %p273
      %p275 = scmp.ne.s32.totalorder %s267, %s270
      %p276 = scmp.eq.s32.totalorder %s37, 0
      %p277 = por %p275, %p276
      %p278 = scmp.ne.s32.totalorder %s267, %s270
      %p279 = scmp.eq.s32.totalorder %s42, 3
      %p280 = por %p278, %p279
      %p281 = scmp.ne.s32.totalorder %s270, %s271
      %p282 = scmp.eq.s32.totalorder %s42, 0
      %p283 = por %p281, %p282
      %p284 = scmp.ne.s32.totalorder %s270, %s271
      %p285 = scmp.eq.s32.totalorder %s43, 3
      %p286 = por %p284, %p285
      %p288 = scmp.ne.s32.totalorder %s271, %s287
      %p289 = scmp.eq.s32.totalorder %s43, 0
      %p290 = por %p288, %p289
      %s291 = ssub.s32 %s45, %s52
      %p292 = scmp.eq.s32.totalorder %s291, 0
      %s294 = sadd.s32 %s293, 1
      %s295 = scalar_select %p292, %s293, %s294
      %p298 = pneg %p292
      %p299 = scmp.eq.s32.totalorder %s37, 3
      %p300 = por %p298, %p299
      %p301 = scmp.ne.s32.totalorder %s293, %s296
      %p302 = scmp.eq.s32.totalorder %s37, 0
      %p303 = por %p301, %p302
      %p304 = scmp.ne.s32.totalorder %s293, %s296
      %p305 = scmp.eq.s32.totalorder %s42, 3
      %p306 = por %p304, %p305
      %p307 = scmp.ne.s32.totalorder %s296, %s297
      %p308 = scmp.eq.s32.totalorder %s42, 0
      %p309 = por %p307, %p308
      %p310 = scmp.ne.s32.totalorder %s296, %s297
      %p311 = scmp.eq.s32.totalorder %s43, 3
      %p312 = por %p310, %p311
      %p314 = scmp.ne.s32.totalorder %s297, %s313
      %p315 = scmp.eq.s32.totalorder %s43, 0
      %p316 = por %p314, %p315
      %s317 = ssub.s32 %s45, %s52
      %p318 = scmp.eq.s32.totalorder %s317, 0
      %s320 = sadd.s32 %s319, 1
      %s321 = scalar_select %p318, %s319, %s320
      %p324 = pneg %p318
      %p325 = scmp.eq.s32.totalorder %s37, 3
      %p326 = por %p324, %p325
      %p327 = scmp.ne.s32.totalorder %s319, %s322
      %p328 = scmp.eq.s32.totalorder %s37, 0
      %p329 = por %p327, %p328
      %p330 = scmp.ne.s32.totalorder %s319, %s322
      %p331 = scmp.eq.s32.totalorder %s42, 3
      %p332 = por %p330, %p331
      %p333 = scmp.ne.s32.totalorder %s322, %s323
      %p334 = scmp.eq.s32.totalorder %s42, 0
      %p335 = por %p333, %p334
      %p336 = scmp.ne.s32.totalorder %s322, %s323
      %p337 = scmp.eq.s32.totalorder %s43, 3
      %p338 = por %p336, %p337
      %p340 = scmp.ne.s32.totalorder %s323, %s339
      %p341 = scmp.eq.s32.totalorder %s43, 0
      %p342 = por %p340, %p341
      %s343 = ssub.s32 %s45, %s52
      %p344 = scmp.eq.s32.totalorder %s343, 0
      %s346 = sadd.s32 %s345, 1
      %s347 = scalar_select %p344, %s345, %s346
      %p350 = pneg %p344
      %p351 = scmp.eq.s32.totalorder %s37, 3
      %p352 = por %p350, %p351
      %p353 = scmp.ne.s32.totalorder %s345, %s348
      %p354 = scmp.eq.s32.totalorder %s37, 0
      %p355 = por %p353, %p354
      %p356 = scmp.ne.s32.totalorder %s345, %s348
      %p357 = scmp.eq.s32.totalorder %s42, 3
      %p358 = por %p356, %p357
      %p359 = scmp.ne.s32.totalorder %s348, %s349
      %p360 = scmp.eq.s32.totalorder %s42, 0
      %p361 = por %p359, %p360
      %p362 = scmp.ne.s32.totalorder %s348, %s349
      %p363 = scmp.eq.s32.totalorder %s43, 3
      %p364 = por %p362, %p363
      %p366 = scmp.ne.s32.totalorder %s349, %s365
      %p367 = scmp.eq.s32.totalorder %s43, 0
      %p368 = por %p366, %p367
      %s369 = ssub.s32 %s45, %s52
      %p370 = scmp.eq.s32.totalorder %s369, 0
      %s372 = sadd.s32 %s371, 1
      %s373 = scalar_select %p370, %s371, %s372
      %p376 = pneg %p370
      %p377 = scmp.eq.s32.totalorder %s37, 3
      %p378 = por %p376, %p377
      %p379 = scmp.ne.s32.totalorder %s371, %s374
      %p380 = scmp.eq.s32.totalorder %s37, 0
      %p381 = por %p379, %p380
      %p382 = scmp.ne.s32.totalorder %s371, %s374
      %p383 = scmp.eq.s32.totalorder %s42, 3
      %p384 = por %p382, %p383
      %p385 = scmp.ne.s32.totalorder %s374, %s375
      %p386 = scmp.eq.s32.totalorder %s42, 0
      %p387 = por %p385, %p386
      %p388 = scmp.ne.s32.totalorder %s374, %s375
      %p389 = scmp.eq.s32.totalorder %s43, 3
      %p390 = por %p388, %p389
      %p392 = scmp.ne.s32.totalorder %s375, %s391
      %p393 = scmp.eq.s32.totalorder %s43, 0
      %p394 = por %p392, %p393
      %s395 = ssub.s32 %s45, %s52
      %p396 = scmp.eq.s32.totalorder %s395, 0
      %s398 = sadd.s32 %s397, 1
      %s399 = scalar_select %p396, %s397, %s398
      %p402 = pneg %p396
      %p403 = scmp.eq.s32.totalorder %s37, 3
      %p404 = por %p402, %p403
      %p405 = scmp.ne.s32.totalorder %s397, %s400
      %p406 = scmp.eq.s32.totalorder %s37, 0
      %p407 = por %p405, %p406
      %p408 = scmp.ne.s32.totalorder %s397, %s400
      %p409 = scmp.eq.s32.totalorder %s42, 3
      %p410 = por %p408, %p409
      %p411 = scmp.ne.s32.totalorder %s400, %s401
      %p412 = scmp.eq.s32.totalorder %s42, 0
      %p413 = por %p411, %p412
      %p414 = scmp.ne.s32.totalorder %s400, %s401
      %p415 = scmp.eq.s32.totalorder %s43, 3
      %p416 = por %p414, %p415
      %p418 = scmp.ne.s32.totalorder %s401, %s417
      %p419 = scmp.eq.s32.totalorder %s43, 0
      %p420 = por %p418, %p419
      %s421 = ssub.s32 %s45, %s52
      %p422 = scmp.eq.s32.totalorder %s421, 0
      %s424 = sadd.s32 %s423, 1
      %s425 = scalar_select %p422, %s423, %s424
      %p428 = pneg %p422
      %p429 = scmp.eq.s32.totalorder %s37, 3
      %p430 = por %p428, %p429
      %p431 = scmp.ne.s32.totalorder %s423, %s426
      %p432 = scmp.eq.s32.totalorder %s37, 0
      %p433 = por %p431, %p432
      %p434 = scmp.ne.s32.totalorder %s423, %s426
      %p435 = scmp.eq.s32.totalorder %s42, 3
      %p436 = por %p434, %p435
      %p437 = scmp.ne.s32.totalorder %s426, %s427
      %p438 = scmp.eq.s32.totalorder %s42, 0
      %p439 = por %p437, %p438
      %p440 = scmp.ne.s32.totalorder %s426, %s427
      %p441 = scmp.eq.s32.totalorder %s43, 3
      %p442 = por %p440, %p441
      %p444 = scmp.ne.s32.totalorder %s427, %s443
      %p445 = scmp.eq.s32.totalorder %s43, 0
      %p446 = por %p444, %p445
      %s447 = ssub.s32 %s45, %s52
      %p448 = scmp.eq.s32.totalorder %s447, 0
      %s450 = sadd.s32 %s449, 1
      %s451 = scalar_select %p448, %s449, %s450
      %p454 = pneg %p448
      %p455 = scmp.eq.s32.totalorder %s37, 3
      %p456 = por %p454, %p455
      %p457 = scmp.ne.s32.totalorder %s449, %s452
      %p458 = scmp.eq.s32.totalorder %s37, 0
      %p459 = por %p457, %p458
      %p460 = scmp.ne.s32.totalorder %s449, %s452
      %p461 = scmp.eq.s32.totalorder %s42, 3
      %p462 = por %p460, %p461
      %p463 = scmp.ne.s32.totalorder %s452, %s453
      %p464 = scmp.eq.s32.totalorder %s42, 0
      %p465 = por %p463, %p464
      %p466 = scmp.ne.s32.totalorder %s452, %s453
      %p467 = scmp.eq.s32.totalorder %s43, 3
      %p468 = por %p466, %p467
      %p470 = scmp.ne.s32.totalorder %s453, %s469
      %p471 = scmp.eq.s32.totalorder %s43, 0
      %p472 = por %p470, %p471
      %s473 = ssub.s32 %s45, %s52
      %p474 = scmp.eq.s32.totalorder %s473, 0
      %s476 = sadd.s32 %s475, 1
      %s477 = scalar_select %p474, %s475, %s476
      %p480 = pneg %p474
      %p481 = scmp.eq.s32.totalorder %s37, 3
      %p482 = por %p480, %p481
      %p483 = scmp.ne.s32.totalorder %s475, %s478
      %p484 = scmp.eq.s32.totalorder %s37, 0
      %p485 = por %p483, %p484
      %p486 = scmp.ne.s32.totalorder %s475, %s478
      %p487 = scmp.eq.s32.totalorder %s42, 3
      %p488 = por %p486, %p487
      %p489 = scmp.ne.s32.totalorder %s478, %s479
      %p490 = scmp.eq.s32.totalorder %s42, 0
      %p491 = por %p489, %p490
      %p492 = scmp.ne.s32.totalorder %s478, %s479
      %p493 = scmp.eq.s32.totalorder %s43, 3
      %p494 = por %p492, %p493
      %p496 = scmp.ne.s32.totalorder %s479, %s495
      %p497 = scmp.eq.s32.totalorder %s43, 0
      %p498 = por %p496, %p497
      %s500 = sadd.s32 %s499, 1
      %p503 = scmp.eq.s32.totalorder %s37, 3
      %p504 = scmp.ne.s32.totalorder %s499, %s501
      %p505 = scmp.eq.s32.totalorder %s37, 0
      %p506 = por %p504, %p505
      %p507 = scmp.ne.s32.totalorder %s499, %s501
      %p508 = scmp.eq.s32.totalorder %s42, 3
      %p509 = por %p507, %p508
      %p510 = scmp.ne.s32.totalorder %s501, %s502
      %p511 = scmp.eq.s32.totalorder %s42, 0
      %p512 = por %p510, %p511
      %p513 = scmp.ne.s32.totalorder %s501, %s502
      %p514 = scmp.eq.s32.totalorder %s43, 3
      %p515 = por %p513, %p514
      %p517 = scmp.ne.s32.totalorder %s502, %s516
      %p518 = scmp.eq.s32.totalorder %s43, 0
      %p519 = por %p517, %p518
      %s521 = sadd.s32 %s520, 1
      %p524 = scmp.eq.s32.totalorder %s37, 3
      %p525 = scmp.ne.s32.totalorder %s520, %s522
      %p526 = scmp.eq.s32.totalorder %s37, 0
      %p527 = por %p525, %p526
      %p528 = scmp.ne.s32.totalorder %s520, %s522
      %p529 = scmp.eq.s32.totalorder %s42, 3
      %p530 = por %p528, %p529
      %p531 = scmp.ne.s32.totalorder %s522, %s523
      %p532 = scmp.eq.s32.totalorder %s42, 0
      %p533 = por %p531, %p532
      %p534 = scmp.ne.s32.totalorder %s522, %s523
      %p535 = scmp.eq.s32.totalorder %s43, 3
      %p536 = por %p534, %p535
      %p538 = scmp.ne.s32.totalorder %s523, %s537
      %p539 = scmp.eq.s32.totalorder %s43, 0
      %p540 = por %p538, %p539
      %s542 = sadd.s32 %s541, 1
      %p545 = scmp.eq.s32.totalorder %s37, 3
      %p546 = scmp.ne.s32.totalorder %s541, %s543
      %p547 = scmp.eq.s32.totalorder %s37, 0
      %p548 = por %p546, %p547
      %p549 = scmp.ne.s32.totalorder %s541, %s543
      %p550 = scmp.eq.s32.totalorder %s42, 3
      %p551 = por %p549, %p550
      %p552 = scmp.ne.s32.totalorder %s543, %s544
      %p553 = scmp.eq.s32.totalorder %s42, 0
      %p554 = por %p552, %p553
      %p555 = scmp.ne.s32.totalorder %s543, %s544
      %p556 = scmp.eq.s32.totalorder %s43, 3
      %p557 = por %p555, %p556
      %p559 = scmp.ne.s32.totalorder %s544, %s558
      %p560 = scmp.eq.s32.totalorder %s43, 0
      %p561 = por %p559, %p560
      %s563 = sadd.s32 %s562, 1
      %p566 = scmp.eq.s32.totalorder %s37, 3
      %p567 = scmp.ne.s32.totalorder %s562, %s564
      %p568 = scmp.eq.s32.totalorder %s37, 0
      %p569 = por %p567, %p568
      %p570 = scmp.ne.s32.totalorder %s562, %s564
      %p571 = scmp.eq.s32.totalorder %s42, 3
      %p572 = por %p570, %p571
      %p573 = scmp.ne.s32.totalorder %s564, %s565
      %p574 = scmp.eq.s32.totalorder %s42, 0
      %p575 = por %p573, %p574
      %p576 = scmp.ne.s32.totalorder %s564, %s565
      %p577 = scmp.eq.s32.totalorder %s43, 3
      %p578 = por %p576, %p577
      %p580 = scmp.ne.s32.totalorder %s565, %s579
      %p581 = scmp.eq.s32.totalorder %s43, 0
      %p582 = por %p580, %p581
      %s583 = ssub.s32 %s44, %s56
      %p584 = scmp.eq.s32.totalorder %s583, 0
      %s586 = sadd.s32 %s585, 1
      %s587 = scalar_select %p584, %s585, %s586
      %p590 = pneg %p584
      %p591 = scmp.eq.s32.totalorder %s37, 3
      %p592 = por %p590, %p591
      %p593 = scmp.ne.s32.totalorder %s585, %s588
      %p594 = scmp.eq.s32.totalorder %s37, 0
      %p595 = por %p593, %p594
      %p596 = scmp.ne.s32.totalorder %s585, %s588
      %p597 = scmp.eq.s32.totalorder %s42, 3
      %p598 = por %p596, %p597
      %p599 = scmp.ne.s32.totalorder %s588, %s589
      %p600 = scmp.eq.s32.totalorder %s42, 0
      %p601 = por %p599, %p600
      %p602 = scmp.ne.s32.totalorder %s588, %s589
      %p603 = scmp.eq.s32.totalorder %s43, 3
      %p604 = por %p602, %p603
      %p606 = scmp.ne.s32.totalorder %s589, %s605
      %p607 = scmp.eq.s32.totalorder %s43, 0
      %p608 = por %p606, %p607
      %p609 = scmp.le.s32.totalorder 1, %s37
      %p610 = scmp.lt.s32.totalorder %s37, 5
      %p611 = pnand %p609, %p610
      %p612 = pneg %p611
      // Predicated region
      $region9: #{tpu_custom_call.1} parent=5 // pred_check
        _
      $region10: #{tpu_custom_call.1} parent=5 // pred_check_branch
        %614 = sbr.rel (%p611) target = $region12
      $region11: #{tpu_custom_call.1} parent=5 // pred_region
        %s615 = ssub.s32 %s37, 1
        // Predicated region
        $region13: #{tpu_custom_call.1} parent=11 // pred_check
          %p616 = pneg %p512
        $region14: #{tpu_custom_call.1} parent=11 // pred_check_branch
          %618 = sbr.rel (%p616) target = $region16
        $region15: #{tpu_custom_call.1} parent=11 // pred_region
          _
        $region16: #{tpu_custom_call.1} parent=11 // pred_fallthru
          _
        // Predicated region
        $region17: #{tpu_custom_call.1} parent=11 // pred_check
          %p619 = pneg %p533
        $region18: #{tpu_custom_call.1} parent=11 // pred_check_branch
          %621 = sbr.rel (%p619) target = $region20
        $region19: #{tpu_custom_call.1} parent=11 // pred_region
          _
        $region20: #{tpu_custom_call.1} parent=11 // pred_fallthru
          _
        // Predicated region
        $region21: #{tpu_custom_call.1} parent=11 // pred_check
          %p622 = pneg %p554
        $region22: #{tpu_custom_call.1} parent=11 // pred_check_branch
          %624 = sbr.rel (%p622) target = $region24
        $region23: #{tpu_custom_call.1} parent=11 // pred_region
          _
        $region24: #{tpu_custom_call.1} parent=11 // pred_fallthru
          _
        // Predicated region
        $region25: #{tpu_custom_call.1} parent=11 // pred_check
          %p625 = pneg %p575
        $region26: #{tpu_custom_call.1} parent=11 // pred_check_branch
          %627 = sbr.rel (%p625) target = $region28
        $region27: #{tpu_custom_call.1} parent=11 // pred_region
          _
        $region28: #{tpu_custom_call.1} parent=11 // pred_fallthru
          _
      $region12: #{tpu_custom_call.1} parent=5 // pred_fallthru
        _
      %p628 = scmp.lt.s32.totalorder %s37, 4
      // Predicated region
      $region29: #{tpu_custom_call.1} parent=5 // pred_check
        %p629 = pneg %p628
      $region30: #{tpu_custom_call.1} parent=5 // pred_check_branch
        %631 = sbr.rel (%p629) target = $region32
      $region31: #{tpu_custom_call.1} parent=5 // pred_region
        // Predicated region
        $region33: #{tpu_custom_call.1} parent=31 // pred_check
          %p632 = pneg %p69
        $region34: #{tpu_custom_call.1} parent=31 // pred_check_branch
          %634 = sbr.rel (%p632) target = $region36
        $region35: #{tpu_custom_call.1} parent=31 // pred_region
          %p635 = scmp.lt.s32.totalorder %s44, 1
          %s636 = scalar_select %p635, %s44, 1
          %s637 = smul.addr %s636, 2
          %s638 = smul.addr %s637, 8
          %s639 = scalar_lea.vmem %s1, %s638
        $region36: #{tpu_custom_call.1} parent=31 // pred_fallthru
          _
        // Predicated region
        $region37: #{tpu_custom_call.1} parent=31 // pred_check
          %p640 = pneg %p95
        $region38: #{tpu_custom_call.1} parent=31 // pred_check_branch
          %642 = sbr.rel (%p640) target = $region40
        $region39: #{tpu_custom_call.1} parent=31 // pred_region
          %p643 = scmp.lt.s32.totalorder %s44, 1
          %s644 = scalar_select %p643, %s44, 1
          %s645 = smul.addr %s644, 2
          %s646 = smul.addr %s645, 8
          %s647 = scalar_lea.vmem %s2, %s646
        $region40: #{tpu_custom_call.1} parent=31 // pred_fallthru
          _
        // Predicated region
        $region41: #{tpu_custom_call.1} parent=31 // pred_check
          %p648 = pneg %p121
        $region42: #{tpu_custom_call.1} parent=31 // pred_check_branch
          %650 = sbr.rel (%p648) target = $region44
        $region43: #{tpu_custom_call.1} parent=31 // pred_region
          %p651 = scmp.lt.s32.totalorder %s44, 1
          %s652 = scalar_select %p651, %s44, 1
          %s653 = smul.addr %s652, 2
          %s654 = smul.addr %s653, 8
          %s655 = scalar_lea.vmem %s3, %s654
        $region44: #{tpu_custom_call.1} parent=31 // pred_fallthru
          _
        // Predicated region
        $region45: #{tpu_custom_call.1} parent=31 // pred_check
          %p656 = pneg %p147
        $region46: #{tpu_custom_call.1} parent=31 // pred_check_branch
          %658 = sbr.rel (%p656) target = $region48
        $region47: #{tpu_custom_call.1} parent=31 // pred_region
          %p659 = scmp.lt.s32.totalorder %s45, 1
          %s660 = scalar_select %p659, %s45, 1
          %s661 = scalar_lea.vmem %s4, %s660
        $region48: #{tpu_custom_call.1} parent=31 // pred_fallthru
          _
        // Predicated region
        $region49: #{tpu_custom_call.1} parent=31 // pred_check
          %p662 = pneg %p173
        $region50: #{tpu_custom_call.1} parent=31 // pred_check_branch
          %664 = sbr.rel (%p662) target = $region52
        $region51: #{tpu_custom_call.1} parent=31 // pred_region
          %p665 = scmp.lt.s32.totalorder %s45, 1
          %s666 = scalar_select %p665, %s45, 1
          %s667 = scalar_lea.vmem %s5, %s666
        $region52: #{tpu_custom_call.1} parent=31 // pred_fallthru
          _
        // Predicated region
        $region53: #{tpu_custom_call.1} parent=31 // pred_check
          %p668 = pneg %p199
        $region54: #{tpu_custom_call.1} parent=31 // pred_check_branch
          %670 = sbr.rel (%p668) target = $region56
        $region55: #{tpu_custom_call.1} parent=31 // pred_region
          %p671 = scmp.lt.s32.totalorder %s45, 1
          %s672 = scalar_select %p671, %s45, 1
          %s673 = smul.addr %s672, 16
          %s674 = smul.addr %s673, 4
          %s675 = scalar_lea.vmem %s6, %s674
        $region56: #{tpu_custom_call.1} parent=31 // pred_fallthru
          _
        // Predicated region
        $region57: #{tpu_custom_call.1} parent=31 // pred_check
          %p676 = pneg %p225
        $region58: #{tpu_custom_call.1} parent=31 // pred_check_branch
          %678 = sbr.rel (%p676) target = $region60
        $region59: #{tpu_custom_call.1} parent=31 // pred_region
          %p679 = scmp.lt.s32.totalorder %s45, 1
          %s680 = scalar_select %p679, %s45, 1
          %s681 = scalar_lea.vmem %s7, %s680
        $region60: #{tpu_custom_call.1} parent=31 // pred_fallthru
          _
        // Predicated region
        $region61: #{tpu_custom_call.1} parent=31 // pred_check
          %p682 = pneg %p251
        $region62: #{tpu_custom_call.1} parent=31 // pred_check_branch
          %684 = sbr.rel (%p682) target = $region64
        $region63: #{tpu_custom_call.1} parent=31 // pred_region
          %p685 = scmp.lt.s32.totalorder %s45, 1
          %s686 = scalar_select %p685, %s45, 1
          %s687 = smul.addr %s686, 4
          %s688 = smul.addr %s687, 4
          %s689 = scalar_lea.vmem %s8, %s688
        $region64: #{tpu_custom_call.1} parent=31 // pred_fallthru
          _
        // Predicated region
        $region65: #{tpu_custom_call.1} parent=31 // pred_check
          %p690 = pneg %p277
        $region66: #{tpu_custom_call.1} parent=31 // pred_check_branch
          %692 = sbr.rel (%p690) target = $region68
        $region67: #{tpu_custom_call.1} parent=31 // pred_region
          %p693 = scmp.lt.s32.totalorder %s45, 1
          %s694 = scalar_select %p693, %s45, 1
          %s695 = scalar_lea.vmem %s9, %s694
        $region68: #{tpu_custom_call.1} parent=31 // pred_fallthru
          _
        // Predicated region
        $region69: #{tpu_custom_call.1} parent=31 // pred_check
          %p696 = pneg %p303
        $region70: #{tpu_custom_call.1} parent=31 // pred_check_branch
          %698 = sbr.rel (%p696) target = $region72
        $region71: #{tpu_custom_call.1} parent=31 // pred_region
          %p699 = scmp.lt.s32.totalorder %s45, 1
          %s700 = scalar_select %p699, %s45, 1
          %s701 = scalar_lea.vmem %s10, %s700
        $region72: #{tpu_custom_call.1} parent=31 // pred_fallthru
          _
        // Predicated region
        $region73: #{tpu_custom_call.1} parent=31 // pred_check
          %p702 = pneg %p329
        $region74: #{tpu_custom_call.1} parent=31 // pred_check_branch
          %704 = sbr.rel (%p702) target = $region76
        $region75: #{tpu_custom_call.1} parent=31 // pred_region
          %p705 = scmp.lt.s32.totalorder %s45, 1
          %s706 = scalar_select %p705, %s45, 1
          %s707 = scalar_lea.vmem %s11, %s706
        $region76: #{tpu_custom_call.1} parent=31 // pred_fallthru
          _
        // Predicated region
        $region77: #{tpu_custom_call.1} parent=31 // pred_check
          %p708 = pneg %p355
        $region78: #{tpu_custom_call.1} parent=31 // pred_check_branch
          %710 = sbr.rel (%p708) target = $region80
        $region79: #{tpu_custom_call.1} parent=31 // pred_region
          %p711 = scmp.lt.s32.totalorder %s45, 1
          %s712 = scalar_select %p711, %s45, 1
          %s713 = smul.addr %s712, 40
          %s714 = smul.addr %s713, 4
          %s715 = scalar_lea.vmem %s12, %s714
        $region80: #{tpu_custom_call.1} parent=31 // pred_fallthru
          _
        // Predicated region
        $region81: #{tpu_custom_call.1} parent=31 // pred_check
          %p716 = pneg %p381
        $region82: #{tpu_custom_call.1} parent=31 // pred_check_branch
          %718 = sbr.rel (%p716) target = $region84
        $region83: #{tpu_custom_call.1} parent=31 // pred_region
          %p719 = scmp.lt.s32.totalorder %s45, 1
          %s720 = scalar_select %p719, %s45, 1
          %s721 = scalar_lea.vmem %s13, %s720
        $region84: #{tpu_custom_call.1} parent=31 // pred_fallthru
          _
        // Predicated region
        $region85: #{tpu_custom_call.1} parent=31 // pred_check
          %p722 = pneg %p407
        $region86: #{tpu_custom_call.1} parent=31 // pred_check_branch
          %724 = sbr.rel (%p722) target = $region88
        $region87: #{tpu_custom_call.1} parent=31 // pred_region
          %p725 = scmp.lt.s32.totalorder %s45, 1
          %s726 = scalar_select %p725, %s45, 1
          %s727 = scalar_lea.vmem %s14, %s726
        $region88: #{tpu_custom_call.1} parent=31 // pred_fallthru
          _
        // Predicated region
        $region89: #{tpu_custom_call.1} parent=31 // pred_check
          %p728 = pneg %p433
        $region90: #{tpu_custom_call.1} parent=31 // pred_check_branch
          %730 = sbr.rel (%p728) target = $region92
        $region91: #{tpu_custom_call.1} parent=31 // pred_region
          %p731 = scmp.lt.s32.totalorder %s45, 1
          %s732 = scalar_select %p731, %s45, 1
          %s733 = scalar_lea.vmem %s15, %s732
        $region92: #{tpu_custom_call.1} parent=31 // pred_fallthru
          _
        // Predicated region
        $region93: #{tpu_custom_call.1} parent=31 // pred_check
          %p734 = pneg %p459
        $region94: #{tpu_custom_call.1} parent=31 // pred_check_branch
          %736 = sbr.rel (%p734) target = $region96
        $region95: #{tpu_custom_call.1} parent=31 // pred_region
          %p737 = scmp.lt.s32.totalorder %s45, 1
          %s738 = scalar_select %p737, %s45, 1
          %s739 = smul.addr %s738, 8
          %s740 = smul.addr %s739, 4
          %s741 = scalar_lea.vmem %s16, %s740
        $region96: #{tpu_custom_call.1} parent=31 // pred_fallthru
          _
        // Predicated region
        $region97: #{tpu_custom_call.1} parent=31 // pred_check
          %p742 = pneg %p485
        $region98: #{tpu_custom_call.1} parent=31 // pred_check_branch
          %744 = sbr.rel (%p742) target = $region100
        $region99: #{tpu_custom_call.1} parent=31 // pred_region
          %p745 = scmp.lt.s32.totalorder %s45, 1
          %s746 = scalar_select %p745, %s45, 1
          %s747 = scalar_lea.vmem %s17, %s746
        $region100: #{tpu_custom_call.1} parent=31 // pred_fallthru
          _
      $region32: #{tpu_custom_call.1} parent=5 // pred_fallthru
        _
      %p748 = scmp.le.s32.totalorder 1, %s37
      %p749 = scmp.lt.s32.totalorder %s37, 5
      %p750 = pnand %p748, %p749
      %p751 = pneg %p750
      // Predicated region
      $region101: #{tpu_custom_call.1} parent=5 // pred_check
        _
      $region102: #{tpu_custom_call.1} parent=5 // pred_check_branch
        %753 = sbr.rel (%p750) target = $region104
      $region103: #{tpu_custom_call.1} parent=5 // pred_region
        %s754 = ssub.s32 %s37, 1
        %p755 = scmp.lt.s32.totalorder %s46, 1
        %s756 = scalar_select %p755, %s46, 1
        %s757 = smul.addr %s756, 2
        %s758 = smul.addr %s757, 8
        %s759 = scalar_lea.vmem %s1, %s758
        %p760 = pneg %p75
        %p761 = pneg %p72
        %p762 = scmp.lt.s32.totalorder %s46, 1
        %s763 = scalar_select %p762, %s46, 1
        %s764 = smul.addr %s763, 2
        %s765 = smul.addr %s764, 8
        %s766 = scalar_lea.vmem %s2, %s765
        %p767 = pneg %p101
        %p768 = pneg %p98
        %p769 = scmp.lt.s32.totalorder %s46, 1
        %s770 = scalar_select %p769, %s46, 1
        %s771 = smul.addr %s770, 2
        %s772 = smul.addr %s771, 8
        %s773 = scalar_lea.vmem %s3, %s772
        %p774 = pneg %p127
        %p775 = pneg %p124
        %p776 = scmp.lt.s32.totalorder %s47, 1
        %s777 = scalar_select %p776, %s47, 1
        %s778 = scalar_lea.vmem %s4, %s777
        %p779 = pneg %p153
        %p780 = pneg %p150
        %p781 = scmp.lt.s32.totalorder %s47, 1
        %s782 = scalar_select %p781, %s47, 1
        %s783 = scalar_lea.vmem %s5, %s782
        %p784 = pneg %p179
        %p785 = pneg %p176
        %p786 = scmp.lt.s32.totalorder %s47, 1
        %s787 = scalar_select %p786, %s47, 1
        %s788 = smul.addr %s787, 16
        %s789 = smul.addr %s788, 4
        %s790 = scalar_lea.vmem %s6, %s789
        %p791 = pneg %p205
        %p792 = pneg %p202
        %p793 = scmp.lt.s32.totalorder %s47, 1
        %s794 = scalar_select %p793, %s47, 1
        %s795 = scalar_lea.vmem %s7, %s794
        %p796 = pneg %p231
        %p797 = pneg %p228
        %p798 = scmp.lt.s32.totalorder %s47, 1
        %s799 = scalar_select %p798, %s47, 1
        %s800 = smul.addr %s799, 4
        %s801 = smul.addr %s800, 4
        %s802 = scalar_lea.vmem %s8, %s801
        %p803 = pneg %p257
        %p804 = pneg %p254
        %p805 = scmp.lt.s32.totalorder %s47, 1
        %s806 = scalar_select %p805, %s47, 1
        %s807 = scalar_lea.vmem %s9, %s806
        %p808 = pneg %p283
        %p809 = pneg %p280
        %p810 = scmp.lt.s32.totalorder %s47, 1
        %s811 = scalar_select %p810, %s47, 1
        %s812 = scalar_lea.vmem %s10, %s811
        %p813 = pneg %p309
        %p814 = pneg %p306
        %p815 = scmp.lt.s32.totalorder %s47, 1
        %s816 = scalar_select %p815, %s47, 1
        %s817 = scalar_lea.vmem %s11, %s816
        %p818 = pneg %p335
        %p819 = pneg %p332
        %p820 = scmp.lt.s32.totalorder %s47, 1
        %s821 = scalar_select %p820, %s47, 1
        %s822 = smul.addr %s821, 40
        %s823 = smul.addr %s822, 4
        %s824 = scalar_lea.vmem %s12, %s823
        %p825 = pneg %p361
        %p826 = pneg %p358
        %p827 = scmp.lt.s32.totalorder %s47, 1
        %s828 = scalar_select %p827, %s47, 1
        %s829 = scalar_lea.vmem %s13, %s828
        %p830 = pneg %p387
        %p831 = pneg %p384
        %p832 = scmp.lt.s32.totalorder %s47, 1
        %s833 = scalar_select %p832, %s47, 1
        %s834 = scalar_lea.vmem %s14, %s833
        %p835 = pneg %p413
        %p836 = pneg %p410
        %p837 = scmp.lt.s32.totalorder %s47, 1
        %s838 = scalar_select %p837, %s47, 1
        %s839 = scalar_lea.vmem %s15, %s838
        %p840 = pneg %p439
        %p841 = pneg %p436
        %p842 = scmp.lt.s32.totalorder %s47, 1
        %s843 = scalar_select %p842, %s47, 1
        %s844 = smul.addr %s843, 8
        %s845 = smul.addr %s844, 4
        %s846 = scalar_lea.vmem %s16, %s845
        %p847 = pneg %p465
        %p848 = pneg %p462
        %p849 = scmp.lt.s32.totalorder %s47, 1
        %s850 = scalar_select %p849, %s47, 1
        %s851 = scalar_lea.vmem %s17, %s850
        %p852 = pneg %p491
        %p853 = pneg %p488
        %p854 = pneg %p512
        %p855 = pneg %p509
        %p856 = pneg %p533
        %p857 = pneg %p530
        %p858 = pneg %p554
        %p859 = pneg %p551
        %p860 = pneg %p575
        %p861 = pneg %p572
        %p862 = pneg %p601
        %p863 = pneg %p598
        %s864 = sand.u32 %s588, 1
        %s865 = scalar_lea.sflag [#allocation7], %s864
        %s866 = sand.u32 %s588, 1
        %s867 = smul.addr %s866, 16
        %s868 = scalar_lea.vmem [#allocation6], %s867
        %p869 = scmp.lt.s32.totalorder %s46, 1
        %s870 = scalar_select %p869, %s46, 1
        %s871 = smul.addr %s870, 2
        %s872 = smul.addr %s871, 8
        %s873 = scalar_lea.vmem %s1, %s872
        %p874 = scmp.lt.s32.totalorder %s46, 1
        %s875 = scalar_select %p874, %s46, 1
        %s876 = smul.addr %s875, 2
        %s877 = smul.addr %s876, 8
        %s878 = scalar_lea.vmem %s2, %s877
        %p879 = scmp.lt.s32.totalorder %s46, 1
        %s880 = scalar_select %p879, %s46, 1
        %s881 = smul.addr %s880, 2
        %s882 = smul.addr %s881, 8
        %s883 = scalar_lea.vmem %s3, %s882
        %p884 = scmp.lt.s32.totalorder %s47, 1
        %s885 = scalar_select %p884, %s47, 1
        %s886 = scalar_lea.vmem %s4, %s885
        %p887 = scmp.lt.s32.totalorder %s47, 1
        %s888 = scalar_select %p887, %s47, 1
        %s889 = scalar_lea.vmem %s5, %s888
        %p890 = scmp.lt.s32.totalorder %s47, 1
        %s891 = scalar_select %p890, %s47, 1
        %s892 = smul.addr %s891, 16
        %s893 = smul.addr %s892, 4
        %s894 = scalar_lea.vmem %s6, %s893
        %p895 = scmp.lt.s32.totalorder %s47, 1
        %s896 = scalar_select %p895, %s47, 1
        %s897 = scalar_lea.vmem %s7, %s896
        %p898 = scmp.lt.s32.totalorder %s47, 1
        %s899 = scalar_select %p898, %s47, 1
        %s900 = smul.addr %s899, 4
        %s901 = smul.addr %s900, 4
        %s902 = scalar_lea.vmem %s8, %s901
        %p903 = scmp.lt.s32.totalorder %s47, 1
        %s904 = scalar_select %p903, %s47, 1
        %s905 = scalar_lea.vmem %s9, %s904
        %p906 = scmp.lt.s32.totalorder %s47, 1
        %s907 = scalar_select %p906, %s47, 1
        %s908 = scalar_lea.vmem %s10, %s907
        %p909 = scmp.lt.s32.totalorder %s47, 1
        %s910 = scalar_select %p909, %s47, 1
        %s911 = scalar_lea.vmem %s11, %s910
        %p912 = scmp.lt.s32.totalorder %s47, 1
        %s913 = scalar_select %p912, %s47, 1
        %s914 = smul.addr %s913, 40
        %s915 = smul.addr %s914, 4
        %s916 = scalar_lea.vmem %s12, %s915
        %p917 = scmp.lt.s32.totalorder %s47, 1
        %s918 = scalar_select %p917, %s47, 1
        %s919 = scalar_lea.vmem %s13, %s918
        %p920 = scmp.lt.s32.totalorder %s47, 1
        %s921 = scalar_select %p920, %s47, 1
        %s922 = scalar_lea.vmem %s14, %s921
        %p923 = scmp.lt.s32.totalorder %s47, 1
        %s924 = scalar_select %p923, %s47, 1
        %s925 = scalar_lea.vmem %s15, %s924
        %p926 = scmp.lt.s32.totalorder %s47, 1
        %s927 = scalar_select %p926, %s47, 1
        %s928 = smul.addr %s927, 8
        %s929 = smul.addr %s928, 4
        %s930 = scalar_lea.vmem %s16, %s929
        %p931 = scmp.lt.s32.totalorder %s47, 1
        %s932 = scalar_select %p931, %s47, 1
        %s933 = scalar_lea.vmem %s17, %s932
        %p935 = scmp.eq.s32.totalorder %s47, 0
        // Predicated region
        $region105: #{tpu_custom_call.1} parent=103 // pred_check
          %p936 = pneg %p935
        $region106: #{tpu_custom_call.1} parent=103 // pred_check_branch
          %938 = sbr.rel (%p936) target = $region108
        $region107: #{tpu_custom_call.1} parent=103 // pred_region
          %v939 = vld [vmem:[%s873] sm:$0xff]
          %v940 = vld [vmem:[%s873 + $0x8] sm:$0xff]
          %941 = vst [vmem:[#allocation2] sm:$0xff] %v939
          %942 = vst [vmem:[#allocation2 + $0x8] sm:$0xff] %v940
          %vm943 = vcmask 523264
          %944 = vst.msk [vmem:[#allocation3] sm:$0xff] %vm943, 0.0
          %945 = vst.msk [vmem:[#allocation3 + $0x8] sm:$0xff] %vm943, 0.0
          %946 = vst.msk [vmem:[#allocation3 + $0x10] sm:$0xff] %vm943, 0.0
          %947 = vst.msk [vmem:[#allocation3 + $0x18] sm:$0xff] %vm943, 0.0
        $region108: #{tpu_custom_call.1} parent=103 // pred_fallthru
          _
        %v948 = vld [vmem:[#allocation2] sm:$0xff]
        %v949 = vld [vmem:[#allocation2 + $0x8] sm:$0xff]
        %v950 = vld [vmem:[%s886] sm:$0x1]
        %v951 = vld [vmem:[%s889] sm:$0x1]
        %952 = vadd.xlane.f32.xlu0 %v948
        %v953 = vpop.xlane.xlu0 %952
        %954 = vadd.xlane.f32.xlu0 %v949
        %v955 = vpop.xlane.xlu0 %954
        %v956 = vrcp.pop 128.0
        %v957 = vmul.f32 %v953, %v956
        %v958 = vmul.f32 %v955, %v956
        %v959 = vsub.f32 %v948, %v957
        %v960 = vsub.f32 %v949, %v958
        %v961 = vmul.f32 %v959, %v959
        %v962 = vmul.f32 %v960, %v960
        %963 = vadd.xlane.f32.xlu0 %v961
        %v964 = vpop.xlane.xlu0 %963
        %965 = vadd.xlane.f32.xlu0 %v962
        %v966 = vpop.xlane.xlu0 %965
        %v967 = vmul.f32 %v964, %v956
        %v968 = vmul.f32 %v966, %v956
        %v969 = vadd.f32 %v967, 1e-05
        %v970 = vadd.f32 %v968, 1e-05
        %v971 = vrsqrt.pop %v969
        %v972 = vrsqrt.pop %v970
        %v973 = vmul.f32 %v959, %v971
        %v974 = vmul.f32 %v960, %v972
        %v976 = vlaneseq
        %v977 = vshrl.u32 %v976, 7
        %v978 = vsub.s32 0, %v977
        %v979 = vrot.slane %v950, %v978
        %v981 = vmul.f32 %v973, %v979
        %v982 = vmul.f32 %v974, %v979
        %v984 = vlaneseq
        %v985 = vshrl.u32 %v984, 7
        %v986 = vsub.s32 0, %v985
        %v987 = vrot.slane %v951, %v986
        %v989 = vadd.f32 %v981, %v987
        %v990 = vadd.f32 %v982, %v987
        %v991 = vmul.f32 %v989, 0.5
        %v992 = vmul.f32 %v990, 0.5
        %v993 = vmul.f32 %v989, 0.044715
        %v994 = vmul.f32 %v990, 0.044715
        %v995 = vmul.f32 %v993, %v989
        %v996 = vmul.f32 %v994, %v990
        %v997 = vmul.f32 %v995, %v989
        %v998 = vmul.f32 %v996, %v990
        %v999 = vadd.f32 %v989, %v997
        %v1000 = vadd.f32 %v990, %v998
        %v1001 = vmul.f32 %v999, 0.7978846
        %v1002 = vmul.f32 %v1000, 0.7978846
        %v1003 = vtanh.pop %v1001
        %v1004 = vtanh.pop %v1002
        %v1005 = vadd.f32 %v1003, 1.0
        %v1006 = vadd.f32 %v1004, 1.0
        %v1007 = vmul.f32 %v991, %v1005
        %v1008 = vmul.f32 %v992, %v1006
        %v1009 = vpack.c.bf16 %v1008, %v1007
        %v1010 = vld [vmem:[%s894] sm:$0xf]
        %v1011 = vld [vmem:[%s894 + $0x4] sm:$0xf]
        %v1012 = vld [vmem:[%s894 + $0x8] sm:$0xf]
        %v1013 = vld [vmem:[%s894 + $0xc] sm:$0xf]
        %v1014 = vld [vmem:[%s894 + $0x10] sm:$0xf]
        %v1015 = vld [vmem:[%s894 + $0x14] sm:$0xf]
        %v1016 = vld [vmem:[%s894 + $0x18] sm:$0xf]
        %v1017 = vld [vmem:[%s894 + $0x1c] sm:$0xf]
        %v1018 = vld [vmem:[%s894 + $0x20] sm:$0xf]
        %v1019 = vld [vmem:[%s894 + $0x24] sm:$0xf]
        %v1020 = vld [vmem:[%s894 + $0x28] sm:$0xf]
        %v1021 = vld [vmem:[%s894 + $0x2c] sm:$0xf]
        %v1022 = vld [vmem:[%s894 + $0x30] sm:$0xf]
        %v1023 = vld [vmem:[%s894 + $0x34] sm:$0xf]
        %v1024 = vld [vmem:[%s894 + $0x38] sm:$0xf]
        %v1025 = vld [vmem:[%s894 + $0x3c] sm:$0xf]
        %v1026 = vld [vmem:[%s897] sm:$0x1]
        %v1028 = vlaneseq
        %v1029 = vshrl.u32 %v1028, 7
        %v1030 = vsub.s32 0, %v1029
        %v1031 = vrot.slane %v1026, %v1030
        %v1049 = vunpack.c.l.b16 %v1010
        %v1050 = vunpack.c.l.b16 %v1011
        %v1051 = vunpack.c.l.b16 %v1012
        %v1052 = vunpack.c.l.b16 %v1013
        %v1053 = vunpack.c.l.b16 %v1014
        %v1054 = vunpack.c.l.b16 %v1015
        %v1055 = vunpack.c.l.b16 %v1016
        %v1056 = vunpack.c.l.b16 %v1017
        %v1057 = vunpack.c.l.b16 %v1018
        %v1058 = vunpack.c.l.b16 %v1019
        %v1059 = vunpack.c.l.b16 %v1020
        %v1060 = vunpack.c.l.b16 %v1021
        %v1061 = vunpack.c.l.b16 %v1022
        %v1062 = vunpack.c.l.b16 %v1023
        %v1063 = vunpack.c.l.b16 %v1024
        %v1064 = vunpack.c.l.b16 %v1025
        %v1065 = vpack.c.b16 %v1050, %v1049
        %v1066 = vpack.c.b16 %v1052, %v1051
        %v1067 = vpack.c.b16 %v1054, %v1053
        %v1068 = vpack.c.b16 %v1056, %v1055
        %v1069 = vpack.c.b16 %v1058, %v1057
        %v1070 = vpack.c.b16 %v1060, %v1059
        %v1071 = vpack.c.b16 %v1062, %v1061
        %v1072 = vpack.c.b16 %v1064, %v1063
        %1081 = vmatprep.subr.bf16.mxu0 0
        %1082 = vmatpush1.bf16.msra.mxu0 %v1072
        %1083 = vmatprep.subr.bf16.mxu0 0
        %1084 = vmatpush1.bf16.msra.mxu0 %v1071
        %1085 = vmatprep.subr.bf16.mxu0 0
        %1086 = vmatpush1.bf16.msra.mxu0 %v1070
        %1087 = vmatprep.subr.bf16.mxu0 0
        %1088 = vmatpush1.bf16.msra.mxu0 %v1069
        %1089 = vmatprep.subr.bf16.mxu0 0
        %1090 = vmatpush1.bf16.msra.mxu0 %v1068
        %1091 = vmatprep.subr.bf16.mxu0 0
        %1092 = vmatpush1.bf16.msra.mxu0 %v1067
        %1093 = vmatprep.subr.bf16.mxu0 0
        %1094 = vmatpush1.bf16.msra.mxu0 %v1066
        %1095 = vmatprep.subr.bf16.mxu0 0
        %1096 = vmatpush1.bf16.msra.mxu0 %v1065
        %1097 = vmatprep.subr.bf16.mxu0 0
        %1098 = vmatpush2.bf16.msra.mxu0 0
        %1099 = vmatprep.subr.bf16.mxu0 0
        %1100 = vmatpush2.bf16.msra.mxu0 0
        %1101 = vmatprep.subr.bf16.mxu0 0
        %1102 = vmatpush2.bf16.msra.mxu0 0
        %1103 = vmatprep.subr.bf16.mxu0 0
        %1104 = vmatpush2.bf16.msra.mxu0 0
        %1105 = vmatprep.subr.bf16.mxu0 0
        %1106 = vmatpush2.bf16.msra.mxu0 0
        %1107 = vmatprep.subr.bf16.mxu0 0
        %1108 = vmatpush2.bf16.msra.mxu0 0
        %1109 = vmatprep.subr.bf16.mxu0 0
        %1110 = vmatpush2.bf16.msra.mxu0 0
        %1111 = vmatprep.subr.bf16.mxu0 0
        %1112 = vmatpush2.bf16.msra.mxu0 0
        %1113 = vmatprep.mubr.bf16.mxu0 0
        %1114 = vmatmul.mubr.bf16.gmra.mxu0 %v1009
        %v1115 = vpop.f32.mrf.mxu0
        %v1116 = vadd.f32 %v1031, %v1115
        %v1117 = vpop.f32.mrf.mxu0
        %v1118 = vpop.f32.mrf.mxu0
        %v1119 = vadd.f32 %v1031, %v1118
        %v1120 = vpop.f32.mrf.mxu0
        %1121 = vdwg.mxu0
        %v1122 = vld [vmem:[%s878] sm:$0xff]
        %v1123 = vld [vmem:[%s878 + $0x8] sm:$0xff]
        %v1124 = vpack.c.bf16 %v1123, %v1122
        %v1125 = vld [vmem:[%s902] sm:$0xf]
        %v1126 = vld [vmem:[%s902 + $0x4] sm:$0xf]
        %v1127 = vld [vmem:[%s902 + $0x8] sm:$0xf]
        %v1128 = vld [vmem:[%s902 + $0xc] sm:$0xf]
        %v1129 = vld [vmem:[%s905] sm:$0x1]
        %v1131 = vlaneseq
        %v1132 = vshrl.u32 %v1131, 7
        %v1133 = vsub.s32 0, %v1132
        %v1134 = vrot.slane %v1129, %v1133
        %v1140 = vunpack.c.l.b16 %v1125
        %v1141 = vunpack.c.l.b16 %v1126
        %v1142 = vunpack.c.l.b16 %v1127
        %v1143 = vunpack.c.l.b16 %v1128
        %v1144 = vpack.c.b16 %v1141, %v1140
        %v1145 = vpack.c.b16 %v1143, %v1142
        %vm1148 = vcmask 261120
        %v1150 = vsel %vm1148, %v1124, 0
        %1152 = vmatprep.subr.bf16.mxu0 0
        %1153 = vmatpush1.bf16.msra.mxu0 0
        %1154 = vmatprep.subr.bf16.mxu0 0
        %1155 = vmatpush1.bf16.msra.mxu0 0
        %1156 = vmatprep.subr.bf16.mxu0 0
        %1157 = vmatpush1.bf16.msra.mxu0 0
        %1158 = vmatprep.subr.bf16.mxu0 0
        %1159 = vmatpush1.bf16.msra.mxu0 0
        %1160 = vmatprep.subr.bf16.mxu0 0
        %1161 = vmatpush1.bf16.msra.mxu0 0
        %1162 = vmatprep.subr.bf16.mxu0 0
        %1163 = vmatpush1.bf16.msra.mxu0 0
        %1164 = vmatprep.subr.bf16.mxu0 0
        %1165 = vmatpush1.bf16.msra.mxu0 %v1145
        %1166 = vmatprep.subr.bf16.mxu0 0
        %1167 = vmatpush1.bf16.msra.mxu0 %v1144
        %1168 = vmatprep.subr.bf16.mxu0 0
        %1169 = vmatpush2.bf16.msra.mxu0 0
        %1170 = vmatprep.subr.bf16.mxu0 0
        %1171 = vmatpush2.bf16.msra.mxu0 0
        %1172 = vmatprep.subr.bf16.mxu0 0
        %1173 = vmatpush2.bf16.msra.mxu0 0
        %1174 = vmatprep.subr.bf16.mxu0 0
        %1175 = vmatpush2.bf16.msra.mxu0 0
        %1176 = vmatprep.subr.bf16.mxu0 0
        %1177 = vmatpush2.bf16.msra.mxu0 0
        %1178 = vmatprep.subr.bf16.mxu0 0
        %1179 = vmatpush2.bf16.msra.mxu0 0
        %1180 = vmatprep.subr.bf16.mxu0 0
        %1181 = vmatpush2.bf16.msra.mxu0 0
        %1182 = vmatprep.subr.bf16.mxu0 0
        %1183 = vmatpush2.bf16.msra.mxu0 0
        %1184 = vmatprep.mubr.bf16.mxu0 0
        %1185 = vmatmul.mubr.bf16.gmra.mxu0 %v1150
        %v1186 = vpop.f32.mrf.mxu0
        %v1187 = vadd.f32 %v1134, %v1186
        %v1188 = vpop.f32.mrf.mxu0
        %v1189 = vpop.f32.mrf.mxu0
        %v1190 = vadd.f32 %v1134, %v1189
        %v1191 = vpop.f32.mrf.mxu0
        %1192 = vdwg.mxu0
        %v1193 = vadd.f32 %v1187, 1.0
        %v1194 = vadd.f32 %v1190, 1.0
        %1197 = vrot.lane.b32.xlu0 %v1193, 64
        %v1198 = vpop.permute.xlu0 %1197
        %1199 = vrot.lane.b32.xlu0 %v1194, 64
        %v1200 = vpop.permute.xlu0 %1199
        %v1203 = vmul.f32 %v1116, %v1198
        %v1204 = vmul.f32 %v1119, %v1200
        %v1205 = vadd.f32 %v1203, %v1187
        %v1206 = vadd.f32 %v1204, %v1190
        %v1207 = vld [vmem:[%s908] sm:$0x1]
        %v1208 = vld [vmem:[%s911] sm:$0x1]
        %vm1209 = vcmask 523264
        %v1210 = vsel %vm1209, %v1205, 0.0
        %1211 = vadd.xlane.f32.xlu0 %v1210
        %v1212 = vpop.xlane.xlu0 %1211
        %v1213 = vsel %vm1209, %v1206, 0.0
        %1214 = vadd.xlane.f32.xlu0 %v1213
        %v1215 = vpop.xlane.xlu0 %1214
        %v1216 = vrcp.pop 64.0
        %v1217 = vmul.f32 %v1212, %v1216
        %v1218 = vmul.f32 %v1215, %v1216
        %v1219 = vsub.f32 %v1205, %v1217
        %v1220 = vsub.f32 %v1206, %v1218
        %v1221 = vmul.f32 %v1219, %v1219
        %v1222 = vmul.f32 %v1220, %v1220
        %v1223 = vsel %vm1209, %v1221, 0.0
        %1224 = vadd.xlane.f32.xlu0 %v1223
        %v1225 = vpop.xlane.xlu0 %1224
        %v1226 = vsel %vm1209, %v1222, 0.0
        %1227 = vadd.xlane.f32.xlu0 %v1226
        %v1228 = vpop.xlane.xlu0 %1227
        %v1229 = vmul.f32 %v1225, %v1216
        %v1230 = vmul.f32 %v1228, %v1216
        %v1231 = vadd.f32 %v1229, 1e-05
        %v1232 = vadd.f32 %v1230, 1e-05
        %v1233 = vrsqrt.pop %v1231
        %v1234 = vrsqrt.pop %v1232
        %v1235 = vmul.f32 %v1219, %v1233
        %v1236 = vmul.f32 %v1220, %v1234
        %v1238 = vlaneseq
        %v1239 = vshrl.u32 %v1238, 7
        %v1240 = vsub.s32 0, %v1239
        %v1241 = vrot.slane %v1207, %v1240
        %v1243 = vmul.f32 %v1235, %v1241
        %v1244 = vmul.f32 %v1236, %v1241
        %v1246 = vlaneseq
        %v1247 = vshrl.u32 %v1246, 7
        %v1248 = vsub.s32 0, %v1247
        %v1249 = vrot.slane %v1208, %v1248
        %v1251 = vadd.f32 %v1243, %v1249
        %v1252 = vadd.f32 %v1244, %v1249
        %v1253 = vmul.f32 %v1251, 0.5
        %v1254 = vmul.f32 %v1252, 0.5
        %v1255 = vmul.f32 %v1251, 0.044715
        %v1256 = vmul.f32 %v1252, 0.044715
        %v1257 = vmul.f32 %v1255, %v1251
        %v1258 = vmul.f32 %v1256, %v1252
        %v1259 = vmul.f32 %v1257, %v1251
        %v1260 = vmul.f32 %v1258, %v1252
        %v1261 = vadd.f32 %v1251, %v1259
        %v1262 = vadd.f32 %v1252, %v1260
        %v1263 = vmul.f32 %v1261, 0.7978846
        %v1264 = vmul.f32 %v1262, 0.7978846
        %v1265 = vtanh.pop %v1263
        %v1266 = vtanh.pop %v1264
        %v1267 = vadd.f32 %v1265, 1.0
        %v1268 = vadd.f32 %v1266, 1.0
        %v1269 = vmul.f32 %v1253, %v1267
        %v1270 = vmul.f32 %v1254, %v1268
        %v1271 = vld [vmem:[%s883] sm:$0xff]
        %v1272 = vld [vmem:[%s883 + $0x8] sm:$0xff]
        %1274 = vset.pattern.permute.xlu0 0
        %1275 = vperm.xlu0 %1274, %v1271
        %v1276 = vpop.permute.xlu0 %1275
        %1279 = vset.pattern.permute.xlu0 0
        %1280 = vperm.xlu0 %1279, %v1272
        %v1281 = vpop.permute.xlu0 %1280
        %v1283 = vmul.f32 %v1269, %v1276
        %v1284 = vmul.f32 %v1270, %v1281
        %1285 = vst.msk [vmem:[#allocation3 + $0x8] sm:$0xff] %vm1209, %v1283
        %1286 = vst.msk [vmem:[#allocation3 + $0x10] sm:$0xff] %vm1209, %v1284
        %s1287 = smul.u32 %s47, 128
        %s1288 = sld [smem:[#allocation5 + %s1287]]
        %s1289 = scalar_lea.vmem [#allocation3], %s1288
        %v1290 = vld [vmem:[%s1289] sm:$0xff]
        %v1291 = vld [vmem:[%s1289 + $0x8] sm:$0xff]
        %s1292 = sadd.s32 %s1287, 1
        %s1293 = sld [smem:[#allocation5 + %s1292]]
        %s1294 = scalar_lea.vmem [#allocation3], %s1293
        %v1295 = vld [vmem:[%s1294] sm:$0xff]
        %v1296 = vld [vmem:[%s1294 + $0x8] sm:$0xff]
        %s1297 = sadd.s32 %s1287, 2
        %s1298 = sld [smem:[#allocation5 + %s1297]]
        %s1299 = scalar_lea.vmem [#allocation3], %s1298
        %v1300 = vld [vmem:[%s1299] sm:$0xff]
        %v1301 = vld [vmem:[%s1299 + $0x8] sm:$0xff]
        %s1302 = sadd.s32 %s1287, 3
        %s1303 = sld [smem:[#allocation5 + %s1302]]
        %s1304 = scalar_lea.vmem [#allocation3], %s1303
        %v1305 = vld [vmem:[%s1304] sm:$0xff]
        %v1306 = vld [vmem:[%s1304 + $0x8] sm:$0xff]
        %s1307 = sadd.s32 %s1287, 4
        %s1308 = sld [smem:[#allocation5 + %s1307]]
        %s1309 = scalar_lea.vmem [#allocation3], %s1308
        %v1310 = vld [vmem:[%s1309] sm:$0xff]
        %v1311 = vld [vmem:[%s1309 + $0x8] sm:$0xff]
        %1314 = vrot.lane.b32.xlu0 %v1295, 64
        %v1315 = vpop.permute.xlu0 %1314
        %1316 = vrot.lane.b32.xlu0 %v1296, 64
        %v1317 = vpop.permute.xlu0 %1316
        %1322 = vrot.lane.b32.xlu0 %v1305, 64
        %v1323 = vpop.permute.xlu0 %1322
        %1324 = vrot.lane.b32.xlu0 %v1306, 64
        %v1325 = vpop.permute.xlu0 %1324
        %v1328 = vsel %vm1209, %v1290, %v1315
        %v1329 = vsel %vm1209, %v1291, %v1317
        %v1330 = vsel %vm1209, %v1300, %v1323
        %v1331 = vsel %vm1209, %v1301, %v1325
        %v1332 = vpack.c.bf16 %v1329, %v1328
        %v1333 = vpack.c.bf16 %v1331, %v1330
        %v1334 = vpack.c.bf16 %v1311, %v1310
        %v1335 = vld [vmem:[%s916] sm:$0xf]
        %v1336 = vld [vmem:[%s916 + $0x4] sm:$0xf]
        %v1337 = vld [vmem:[%s916 + $0x8] sm:$0xf]
        %v1338 = vld [vmem:[%s916 + $0xc] sm:$0xf]
        %v1339 = vld [vmem:[%s916 + $0x10] sm:$0xf]
        %v1340 = vld [vmem:[%s916 + $0x14] sm:$0xf]
        %v1341 = vld [vmem:[%s916 + $0x18] sm:$0xf]
        %v1342 = vld [vmem:[%s916 + $0x1c] sm:$0xf]
        %v1343 = vld [vmem:[%s916 + $0x20] sm:$0xf]
        %v1344 = vld [vmem:[%s916 + $0x24] sm:$0xf]
        %v1345 = vld [vmem:[%s916 + $0x28] sm:$0xf]
        %v1346 = vld [vmem:[%s916 + $0x2c] sm:$0xf]
        %v1347 = vld [vmem:[%s916 + $0x30] sm:$0xf]
        %v1348 = vld [vmem:[%s916 + $0x34] sm:$0xf]
        %v1349 = vld [vmem:[%s916 + $0x38] sm:$0xf]
        %v1350 = vld [vmem:[%s916 + $0x3c] sm:$0xf]
        %v1351 = vld [vmem:[%s916 + $0x40] sm:$0xf]
        %v1352 = vld [vmem:[%s916 + $0x44] sm:$0xf]
        %v1353 = vld [vmem:[%s916 + $0x48] sm:$0xf]
        %v1354 = vld [vmem:[%s916 + $0x4c] sm:$0xf]
        %v1355 = vld [vmem:[%s916 + $0x50] sm:$0xf]
        %v1356 = vld [vmem:[%s916 + $0x54] sm:$0xf]
        %v1357 = vld [vmem:[%s916 + $0x58] sm:$0xf]
        %v1358 = vld [vmem:[%s916 + $0x5c] sm:$0xf]
        %v1359 = vld [vmem:[%s916 + $0x60] sm:$0xf]
        %v1360 = vld [vmem:[%s916 + $0x64] sm:$0xf]
        %v1361 = vld [vmem:[%s916 + $0x68] sm:$0xf]
        %v1362 = vld [vmem:[%s916 + $0x6c] sm:$0xf]
        %v1363 = vld [vmem:[%s916 + $0x70] sm:$0xf]
        %v1364 = vld [vmem:[%s916 + $0x74] sm:$0xf]
        %v1365 = vld [vmem:[%s916 + $0x78] sm:$0xf]
        %v1366 = vld [vmem:[%s916 + $0x7c] sm:$0xf]
        %v1367 = vld [vmem:[%s916 + $0x80] sm:$0xf]
        %v1368 = vld [vmem:[%s916 + $0x84] sm:$0xf]
        %v1369 = vld [vmem:[%s916 + $0x88] sm:$0xf]
        %v1370 = vld [vmem:[%s916 + $0x8c] sm:$0xf]
        %v1371 = vld [vmem:[%s916 + $0x90] sm:$0xf]
        %v1372 = vld [vmem:[%s916 + $0x94] sm:$0xf]
        %v1373 = vld [vmem:[%s916 + $0x98] sm:$0xf]
        %v1374 = vld [vmem:[%s916 + $0x9c] sm:$0xf]
        %v1375 = vld [vmem:[%s919] sm:$0x1]
        %v1377 = vlaneseq
        %v1378 = vshrl.u32 %v1377, 7
        %v1379 = vsub.s32 0, %v1378
        %v1380 = vrot.slane %v1375, %v1379
        %v1422 = vunpack.c.l.b16 %v1335
        %v1423 = vunpack.c.l.b16 %v1336
        %v1424 = vunpack.c.l.b16 %v1337
        %v1425 = vunpack.c.l.b16 %v1338
        %v1426 = vunpack.c.l.b16 %v1339
        %v1427 = vunpack.c.l.b16 %v1340
        %v1428 = vunpack.c.l.b16 %v1341
        %v1429 = vunpack.c.l.b16 %v1342
        %v1430 = vunpack.c.l.b16 %v1343
        %v1431 = vunpack.c.l.b16 %v1344
        %v1432 = vunpack.c.l.b16 %v1345
        %v1433 = vunpack.c.l.b16 %v1346
        %v1434 = vunpack.c.l.b16 %v1347
        %v1435 = vunpack.c.l.b16 %v1348
        %v1436 = vunpack.c.l.b16 %v1349
        %v1437 = vunpack.c.l.b16 %v1350
        %v1438 = vunpack.c.l.b16 %v1351
        %v1439 = vunpack.c.l.b16 %v1352
        %v1440 = vunpack.c.l.b16 %v1353
        %v1441 = vunpack.c.l.b16 %v1354
        %v1442 = vunpack.c.l.b16 %v1355
        %v1443 = vunpack.c.l.b16 %v1356
        %v1444 = vunpack.c.l.b16 %v1357
        %v1445 = vunpack.c.l.b16 %v1358
        %v1446 = vunpack.c.l.b16 %v1359
        %v1447 = vunpack.c.l.b16 %v1360
        %v1448 = vunpack.c.l.b16 %v1361
        %v1449 = vunpack.c.l.b16 %v1362
        %v1450 = vunpack.c.l.b16 %v1363
        %v1451 = vunpack.c.l.b16 %v1364
        %v1452 = vunpack.c.l.b16 %v1365
        %v1453 = vunpack.c.l.b16 %v1366
        %v1454 = vunpack.c.l.b16 %v1367
        %v1455 = vunpack.c.l.b16 %v1368
        %v1456 = vunpack.c.l.b16 %v1369
        %v1457 = vunpack.c.l.b16 %v1370
        %v1458 = vunpack.c.l.b16 %v1371
        %v1459 = vunpack.c.l.b16 %v1372
        %v1460 = vunpack.c.l.b16 %v1373
        %v1461 = vunpack.c.l.b16 %v1374
        %v1462 = vpack.c.b16 %v1423, %v1422
        %v1463 = vpack.c.b16 %v1425, %v1424
        %v1464 = vpack.c.b16 %v1427, %v1426
        %v1465 = vpack.c.b16 %v1429, %v1428
        %v1466 = vpack.c.b16 %v1431, %v1430
        %v1467 = vpack.c.b16 %v1433, %v1432
        %v1468 = vpack.c.b16 %v1435, %v1434
        %v1469 = vpack.c.b16 %v1437, %v1436
        %v1470 = vpack.c.b16 %v1439, %v1438
        %v1471 = vpack.c.b16 %v1441, %v1440
        %v1472 = vpack.c.b16 %v1443, %v1442
        %v1473 = vpack.c.b16 %v1445, %v1444
        %v1474 = vpack.c.b16 %v1447, %v1446
        %v1475 = vpack.c.b16 %v1449, %v1448
        %v1476 = vpack.c.b16 %v1451, %v1450
        %v1477 = vpack.c.b16 %v1453, %v1452
        %v1478 = vpack.c.b16 %v1455, %v1454
        %v1479 = vpack.c.b16 %v1457, %v1456
        %v1480 = vpack.c.b16 %v1459, %v1458
        %v1481 = vpack.c.b16 %v1461, %v1460
        %v1503 = vsel %vm1209, %v1334, 0
        %1505 = vmatprep.subr.bf16.mxu0 0
        %1506 = vmatpush1.bf16.msra.mxu0 %v1469
        %1507 = vmatprep.subr.bf16.mxu0 0
        %1508 = vmatpush1.bf16.msra.mxu0 %v1468
        %1509 = vmatprep.subr.bf16.mxu0 0
        %1510 = vmatpush1.bf16.msra.mxu0 %v1467
        %1511 = vmatprep.subr.bf16.mxu0 0
        %1512 = vmatpush1.bf16.msra.mxu0 %v1466
        %1513 = vmatprep.subr.bf16.mxu0 0
        %1514 = vmatpush1.bf16.msra.mxu0 %v1465
        %1515 = vmatprep.subr.bf16.mxu0 0
        %1516 = vmatpush1.bf16.msra.mxu0 %v1464
        %1517 = vmatprep.subr.bf16.mxu0 0
        %1518 = vmatpush1.bf16.msra.mxu0 %v1463
        %1519 = vmatprep.subr.bf16.mxu0 0
        %1520 = vmatpush1.bf16.msra.mxu0 %v1462
        %1521 = vmatprep.subr.bf16.mxu0 0
        %1522 = vmatpush2.bf16.msra.mxu0 %v1477
        %1523 = vmatprep.subr.bf16.mxu0 0
        %1524 = vmatpush2.bf16.msra.mxu0 %v1476
        %1525 = vmatprep.subr.bf16.mxu0 0
        %1526 = vmatpush2.bf16.msra.mxu0 %v1475
        %1527 = vmatprep.subr.bf16.mxu0 0
        %1528 = vmatpush2.bf16.msra.mxu0 %v1474
        %1529 = vmatprep.subr.bf16.mxu0 0
        %1530 = vmatpush2.bf16.msra.mxu0 %v1473
        %1531 = vmatprep.subr.bf16.mxu0 0
        %1532 = vmatpush2.bf16.msra.mxu0 %v1472
        %1533 = vmatprep.subr.bf16.mxu0 0
        %1534 = vmatpush2.bf16.msra.mxu0 %v1471
        %1535 = vmatprep.subr.bf16.mxu0 0
        %1536 = vmatpush2.bf16.msra.mxu0 %v1470
        %1537 = vmatprep.mubr.bf16.mxu0 %v1333
        %1538 = vmatmul.mubr.bf16.gmra.mxu0 %v1332
        %v1539 = vpop.f32.mrf.mxu0
        %v1540 = vadd.f32 %v1380, %v1539
        %v1541 = vpop.f32.mrf.mxu0
        %v1542 = vpop.f32.mrf.mxu0
        %v1543 = vadd.f32 %v1380, %v1542
        %v1544 = vpop.f32.mrf.mxu0
        %1545 = vdwg.mxu0
        %1546 = vmatprep.subr.bf16.mxu0 0
        %1547 = vmatpush1.bf16.msra.mxu0 0
        %1548 = vmatprep.subr.bf16.mxu0 0
        %1549 = vmatpush1.bf16.msra.mxu0 0
        %1550 = vmatprep.subr.bf16.mxu0 0
        %1551 = vmatpush1.bf16.msra.mxu0 0
        %1552 = vmatprep.subr.bf16.mxu0 0
        %1553 = vmatpush1.bf16.msra.mxu0 0
        %1554 = vmatprep.subr.bf16.mxu0 0
        %1555 = vmatpush1.bf16.msra.mxu0 %v1481
        %1556 = vmatprep.subr.bf16.mxu0 0
        %1557 = vmatpush1.bf16.msra.mxu0 %v1480
        %1558 = vmatprep.subr.bf16.mxu0 0
        %1559 = vmatpush1.bf16.msra.mxu0 %v1479
        %1560 = vmatprep.subr.bf16.mxu0 0
        %1561 = vmatpush1.bf16.msra.mxu0 %v1478
        %1562 = vmatprep.subr.bf16.mxu0 0
        %1563 = vmatpush2.bf16.msra.mxu0 0
        %1564 = vmatprep.subr.bf16.mxu0 0
        %1565 = vmatpush2.bf16.msra.mxu0 0
        %1566 = vmatprep.subr.bf16.mxu0 0
        %1567 = vmatpush2.bf16.msra.mxu0 0
        %1568 = vmatprep.subr.bf16.mxu0 0
        %1569 = vmatpush2.bf16.msra.mxu0 0
        %1570 = vmatprep.subr.bf16.mxu0 0
        %1571 = vmatpush2.bf16.msra.mxu0 0
        %1572 = vmatprep.subr.bf16.mxu0 0
        %1573 = vmatpush2.bf16.msra.mxu0 0
        %1574 = vmatprep.subr.bf16.mxu0 0
        %1575 = vmatpush2.bf16.msra.mxu0 0
        %1576 = vmatprep.subr.bf16.mxu0 0
        %1577 = vmatpush2.bf16.msra.mxu0 0
        %1578 = vmatprep.mubr.bf16.mxu0 0
        %1579 = vmatmul.mubr.bf16.gmra.mxu0 %v1503
        %v1580 = vpop.f32.mrf.mxu0
        %v1581 = vadd.f32 %v1540, %v1580
        %v1582 = vpop.f32.mrf.mxu0
        %v1583 = vpop.f32.mrf.mxu0
        %v1584 = vadd.f32 %v1543, %v1583
        %v1585 = vpop.f32.mrf.mxu0
        %1586 = vdwg.mxu0
        %v1587 = vld [vmem:[%s922] sm:$0x1]
        %v1588 = vld [vmem:[%s925] sm:$0x1]
        %v1589 = vsel %vm1209, %v1581, 0.0
        %1590 = vadd.xlane.f32.xlu0 %v1589
        %v1591 = vpop.xlane.xlu0 %1590
        %v1592 = vsel %vm1209, %v1584, 0.0
        %1593 = vadd.xlane.f32.xlu0 %v1592
        %v1594 = vpop.xlane.xlu0 %1593
        %v1595 = vmul.f32 %v1591, %v1216
        %v1596 = vmul.f32 %v1594, %v1216
        %v1597 = vsub.f32 %v1581, %v1595
        %v1598 = vsub.f32 %v1584, %v1596
        %v1599 = vmul.f32 %v1597, %v1597
        %v1600 = vmul.f32 %v1598, %v1598
        %v1601 = vsel %vm1209, %v1599, 0.0
        %1602 = vadd.xlane.f32.xlu0 %v1601
        %v1603 = vpop.xlane.xlu0 %1602
        %v1604 = vsel %vm1209, %v1600, 0.0
        %1605 = vadd.xlane.f32.xlu0 %v1604
        %v1606 = vpop.xlane.xlu0 %1605
        %v1607 = vmul.f32 %v1603, %v1216
        %v1608 = vmul.f32 %v1606, %v1216
        %v1609 = vadd.f32 %v1607, 1e-05
        %v1610 = vadd.f32 %v1608, 1e-05
        %v1611 = vrsqrt.pop %v1609
        %v1612 = vrsqrt.pop %v1610
        %v1613 = vmul.f32 %v1597, %v1611
        %v1614 = vmul.f32 %v1598, %v1612
        %v1616 = vlaneseq
        %v1617 = vshrl.u32 %v1616, 7
        %v1618 = vsub.s32 0, %v1617
        %v1619 = vrot.slane %v1587, %v1618
        %v1621 = vmul.f32 %v1613, %v1619
        %v1622 = vmul.f32 %v1614, %v1619
        %v1624 = vlaneseq
        %v1625 = vshrl.u32 %v1624, 7
        %v1626 = vsub.s32 0, %v1625
        %v1627 = vrot.slane %v1588, %v1626
        %v1629 = vadd.f32 %v1621, %v1627
        %v1630 = vadd.f32 %v1622, %v1627
        %v1631 = vmul.f32 %v1629, 0.5
        %v1632 = vmul.f32 %v1630, 0.5
        %v1633 = vmul.f32 %v1629, 0.044715
        %v1634 = vmul.f32 %v1630, 0.044715
        %v1635 = vmul.f32 %v1633, %v1629
        %v1636 = vmul.f32 %v1634, %v1630
        %v1637 = vmul.f32 %v1635, %v1629
        %v1638 = vmul.f32 %v1636, %v1630
        %v1639 = vadd.f32 %v1629, %v1637
        %v1640 = vadd.f32 %v1630, %v1638
        %v1641 = vmul.f32 %v1639, 0.7978846
        %v1642 = vmul.f32 %v1640, 0.7978846
        %v1643 = vtanh.pop %v1641
        %v1644 = vtanh.pop %v1642
        %v1645 = vadd.f32 %v1643, 1.0
        %v1646 = vadd.f32 %v1644, 1.0
        %v1647 = vmul.f32 %v1631, %v1645
        %v1648 = vmul.f32 %v1632, %v1646
        %v1649 = vpack.c.bf16 %v1648, %v1647
        %v1650 = vld [vmem:[%s930] sm:$0xf]
        %v1651 = vld [vmem:[%s930 + $0x4] sm:$0xf]
        %v1652 = vld [vmem:[%s930 + $0x8] sm:$0xf]
        %v1653 = vld [vmem:[%s930 + $0xc] sm:$0xf]
        %v1654 = vld [vmem:[%s930 + $0x10] sm:$0xf]
        %v1655 = vld [vmem:[%s930 + $0x14] sm:$0xf]
        %v1656 = vld [vmem:[%s930 + $0x18] sm:$0xf]
        %v1657 = vld [vmem:[%s930 + $0x1c] sm:$0xf]
        %v1658 = vld [vmem:[%s933] sm:$0x1]
        %v1660 = vlaneseq
        %v1661 = vshrl.u32 %v1660, 7
        %v1662 = vsub.s32 0, %v1661
        %v1663 = vrot.slane %v1658, %v1662
        %v1673 = vunpack.c.l.b16 %v1650
        %v1674 = vunpack.c.l.b16 %v1651
        %v1675 = vunpack.c.l.b16 %v1652
        %v1676 = vunpack.c.l.b16 %v1653
        %v1677 = vunpack.c.l.b16 %v1654
        %v1678 = vunpack.c.l.b16 %v1655
        %v1679 = vunpack.c.l.b16 %v1656
        %v1680 = vunpack.c.l.b16 %v1657
        %v1681 = vpack.c.b16 %v1674, %v1673
        %v1682 = vpack.c.b16 %v1676, %v1675
        %v1683 = vpack.c.b16 %v1678, %v1677
        %v1684 = vpack.c.b16 %v1680, %v1679
        %v1690 = vsel %vm1209, %v1649, 0
        %1692 = vmatprep.subr.bf16.mxu0 0
        %1693 = vmatpush1.bf16.msra.mxu0 0
        %1694 = vmatprep.subr.bf16.mxu0 0
        %1695 = vmatpush1.bf16.msra.mxu0 0
        %1696 = vmatprep.subr.bf16.mxu0 0
        %1697 = vmatpush1.bf16.msra.mxu0 0
        %1698 = vmatprep.subr.bf16.mxu0 0
        %1699 = vmatpush1.bf16.msra.mxu0 0
        %1700 = vmatprep.subr.bf16.mxu0 0
        %1701 = vmatpush1.bf16.msra.mxu0 %v1684
        %1702 = vmatprep.subr.bf16.mxu0 0
        %1703 = vmatpush1.bf16.msra.mxu0 %v1683
        %1704 = vmatprep.subr.bf16.mxu0 0
        %1705 = vmatpush1.bf16.msra.mxu0 %v1682
        %1706 = vmatprep.subr.bf16.mxu0 0
        %1707 = vmatpush1.bf16.msra.mxu0 %v1681
        %1708 = vmatprep.subr.bf16.mxu0 0
        %1709 = vmatpush2.bf16.msra.mxu0 0
        %1710 = vmatprep.subr.bf16.mxu0 0
        %1711 = vmatpush2.bf16.msra.mxu0 0
        %1712 = vmatprep.subr.bf16.mxu0 0
        %1713 = vmatpush2.bf16.msra.mxu0 0
        %1714 = vmatprep.subr.bf16.mxu0 0
        %1715 = vmatpush2.bf16.msra.mxu0 0
        %1716 = vmatprep.subr.bf16.mxu0 0
        %1717 = vmatpush2.bf16.msra.mxu0 0
        %1718 = vmatprep.subr.bf16.mxu0 0
        %1719 = vmatpush2.bf16.msra.mxu0 0
        %1720 = vmatprep.subr.bf16.mxu0 0
        %1721 = vmatpush2.bf16.msra.mxu0 0
        %1722 = vmatprep.subr.bf16.mxu0 0
        %1723 = vmatpush2.bf16.msra.mxu0 0
        %1724 = vmatprep.mubr.bf16.mxu0 0
        %1725 = vmatmul.mubr.bf16.gmra.mxu0 %v1690
        %v1726 = vpop.f32.mrf.mxu0
        %v1727 = vadd.f32 %v1663, %v1726
        %v1728 = vpop.f32.mrf.mxu0
        %v1729 = vpop.f32.mrf.mxu0
        %v1730 = vadd.f32 %v1663, %v1729
        %v1731 = vpop.f32.mrf.mxu0
        %1732 = vdwg.mxu0
        %v1733 = vadd.f32 %v948, %v1727
        %v1734 = vadd.f32 %v949, %v1730
        %1735 = vst [vmem:[#allocation2] sm:$0xff] %v1733
        %1736 = vst [vmem:[#allocation2 + $0x8] sm:$0xff] %v1734
        %p1737 = scmp.eq.s32.totalorder %s47, 1
        // Predicated region
        $region109: #{tpu_custom_call.1} parent=103 // pred_check
          %p1738 = pneg %p1737
        $region110: #{tpu_custom_call.1} parent=103 // pred_check_branch
          %1740 = sbr.rel (%p1738) target = $region112
        $region111: #{tpu_custom_call.1} parent=103 // pred_region
          %v1741 = vld [vmem:[%s18] sm:$0x1]
          %v1742 = vld [vmem:[%s19] sm:$0x1]
          %1743 = vadd.xlane.f32.xlu0 %v1733
          %v1744 = vpop.xlane.xlu0 %1743
          %1745 = vadd.xlane.f32.xlu0 %v1734
          %v1746 = vpop.xlane.xlu0 %1745
          %v1747 = vmul.f32 %v1744, %v956
          %v1748 = vmul.f32 %v1746, %v956
          %v1749 = vsub.f32 %v1733, %v1747
          %v1750 = vsub.f32 %v1734, %v1748
          %v1751 = vmul.f32 %v1749, %v1749
          %v1752 = vmul.f32 %v1750, %v1750
          %1753 = vadd.xlane.f32.xlu0 %v1751
          %v1754 = vpop.xlane.xlu0 %1753
          %1755 = vadd.xlane.f32.xlu0 %v1752
          %v1756 = vpop.xlane.xlu0 %1755
          %v1757 = vmul.f32 %v1754, %v956
          %v1758 = vmul.f32 %v1756, %v956
          %v1759 = vadd.f32 %v1757, 1e-05
          %v1760 = vadd.f32 %v1758, 1e-05
          %v1761 = vrsqrt.pop %v1759
          %v1762 = vrsqrt.pop %v1760
          %v1763 = vmul.f32 %v1749, %v1761
          %v1764 = vmul.f32 %v1750, %v1762
          %v1766 = vlaneseq
          %v1767 = vshrl.u32 %v1766, 7
          %v1768 = vsub.s32 0, %v1767
          %v1769 = vrot.slane %v1741, %v1768
          %v1771 = vmul.f32 %v1763, %v1769
          %v1772 = vmul.f32 %v1764, %v1769
          %v1774 = vlaneseq
          %v1775 = vshrl.u32 %v1774, 7
          %v1776 = vsub.s32 0, %v1775
          %v1777 = vrot.slane %v1742, %v1776
          %v1779 = vadd.f32 %v1771, %v1777
          %v1780 = vadd.f32 %v1772, %v1777
          %v1781 = vpack.c.bf16 %v1780, %v1779
          %v1782 = vld [vmem:[%s20] sm:$0xf]
          %v1783 = vld [vmem:[%s20 + $0x4] sm:$0xf]
          %v1784 = vld [vmem:[%s20 + $0x8] sm:$0xf]
          %v1785 = vld [vmem:[%s20 + $0xc] sm:$0xf]
          %v1786 = vld [vmem:[%s20 + $0x10] sm:$0xf]
          %v1787 = vld [vmem:[%s20 + $0x14] sm:$0xf]
          %v1788 = vld [vmem:[%s20 + $0x18] sm:$0xf]
          %v1789 = vld [vmem:[%s20 + $0x1c] sm:$0xf]
          %v1790 = vld [vmem:[%s20 + $0x20] sm:$0xf]
          %v1791 = vld [vmem:[%s20 + $0x24] sm:$0xf]
          %v1792 = vld [vmem:[%s20 + $0x28] sm:$0xf]
          %v1793 = vld [vmem:[%s20 + $0x2c] sm:$0xf]
          %v1794 = vld [vmem:[%s20 + $0x30] sm:$0xf]
          %v1795 = vld [vmem:[%s20 + $0x34] sm:$0xf]
          %v1796 = vld [vmem:[%s20 + $0x38] sm:$0xf]
          %v1797 = vld [vmem:[%s20 + $0x3c] sm:$0xf]
          %v1798 = vld [vmem:[%s21] sm:$0x1]
          %v1800 = vlaneseq
          %v1801 = vshrl.u32 %v1800, 7
          %v1802 = vsub.s32 0, %v1801
          %v1803 = vrot.slane %v1798, %v1802
          %v1821 = vunpack.c.l.b16 %v1782
          %v1822 = vunpack.c.l.b16 %v1783
          %v1823 = vunpack.c.l.b16 %v1784
          %v1824 = vunpack.c.l.b16 %v1785
          %v1825 = vunpack.c.l.b16 %v1786
          %v1826 = vunpack.c.l.b16 %v1787
          %v1827 = vunpack.c.l.b16 %v1788
          %v1828 = vunpack.c.l.b16 %v1789
          %v1829 = vunpack.c.l.b16 %v1790
          %v1830 = vunpack.c.l.b16 %v1791
          %v1831 = vunpack.c.l.b16 %v1792
          %v1832 = vunpack.c.l.b16 %v1793
          %v1833 = vunpack.c.l.b16 %v1794
          %v1834 = vunpack.c.l.b16 %v1795
          %v1835 = vunpack.c.l.b16 %v1796
          %v1836 = vunpack.c.l.b16 %v1797
          %v1837 = vpack.c.b16 %v1822, %v1821
          %v1838 = vpack.c.b16 %v1824, %v1823
          %v1839 = vpack.c.b16 %v1826, %v1825
          %v1840 = vpack.c.b16 %v1828, %v1827
          %v1841 = vpack.c.b16 %v1830, %v1829
          %v1842 = vpack.c.b16 %v1832, %v1831
          %v1843 = vpack.c.b16 %v1834, %v1833
          %v1844 = vpack.c.b16 %v1836, %v1835
          %1853 = vmatprep.subr.bf16.mxu0 0
          %1854 = vmatpush1.bf16.msra.mxu0 %v1844
          %1855 = vmatprep.subr.bf16.mxu0 0
          %1856 = vmatpush1.bf16.msra.mxu0 %v1843
          %1857 = vmatprep.subr.bf16.mxu0 0
          %1858 = vmatpush1.bf16.msra.mxu0 %v1842
          %1859 = vmatprep.subr.bf16.mxu0 0
          %1860 = vmatpush1.bf16.msra.mxu0 %v1841
          %1861 = vmatprep.subr.bf16.mxu0 0
          %1862 = vmatpush1.bf16.msra.mxu0 %v1840
          %1863 = vmatprep.subr.bf16.mxu0 0
          %1864 = vmatpush1.bf16.msra.mxu0 %v1839
          %1865 = vmatprep.subr.bf16.mxu0 0
          %1866 = vmatpush1.bf16.msra.mxu0 %v1838
          %1867 = vmatprep.subr.bf16.mxu0 0
          %1868 = vmatpush1.bf16.msra.mxu0 %v1837
          %1869 = vmatprep.subr.bf16.mxu0 0
          %1870 = vmatpush2.bf16.msra.mxu0 0
          %1871 = vmatprep.subr.bf16.mxu0 0
          %1872 = vmatpush2.bf16.msra.mxu0 0
          %1873 = vmatprep.subr.bf16.mxu0 0
          %1874 = vmatpush2.bf16.msra.mxu0 0
          %1875 = vmatprep.subr.bf16.mxu0 0
          %1876 = vmatpush2.bf16.msra.mxu0 0
          %1877 = vmatprep.subr.bf16.mxu0 0
          %1878 = vmatpush2.bf16.msra.mxu0 0
          %1879 = vmatprep.subr.bf16.mxu0 0
          %1880 = vmatpush2.bf16.msra.mxu0 0
          %1881 = vmatprep.subr.bf16.mxu0 0
          %1882 = vmatpush2.bf16.msra.mxu0 0
          %1883 = vmatprep.subr.bf16.mxu0 0
          %1884 = vmatpush2.bf16.msra.mxu0 0
          %1885 = vmatprep.mubr.bf16.mxu0 0
          %1886 = vmatmul.mubr.bf16.gmra.mxu0 %v1781
          %v1887 = vpop.f32.mrf.mxu0
          %v1888 = vadd.f32 %v1803, %v1887
          %v1889 = vpop.f32.mrf.mxu0
          %v1890 = vpop.f32.mrf.mxu0
          %v1891 = vadd.f32 %v1803, %v1890
          %v1892 = vpop.f32.mrf.mxu0
          %1893 = vdwg.mxu0
          %1894 = vst [vmem:[%s868] sm:$0xff] %v1888
          %1895 = vst [vmem:[%s868 + $0x8] sm:$0xff] %v1891
        $region112: #{tpu_custom_call.1} parent=103 // pred_fallthru
          _
        %s1896 = sand.u32 %s588, 1
        %s1897 = scalar_lea.sflag [#allocation7], %s1896
        %s1898 = sand.u32 %s588, 1
        %s1899 = smul.addr %s1898, 16
        %s1900 = scalar_lea.vmem [#allocation6], %s1899
        // Predicated region
        $region113: #{tpu_custom_call.1} parent=103 // pred_check
          %p1901 = pneg %p598
        $region114: #{tpu_custom_call.1} parent=103 // pred_check_branch
          %1903 = sbr.rel (%p1901) target = $region116
        $region115: #{tpu_custom_call.1} parent=103 // pred_region
          %s1905 = ssub.s32 256, 256
          %1906 = vsyncadd %s1897, %s1905
          %s1907 = smul.addr %s46, 2
          %s1908 = smul.addr %s1907, 128
          %s1909 = scalar_lea.hbm %s22, %s1908
          %s1910 = sshll.u32 %s1900, 4
          %s1911 = int_to_ptr.vmem [resolvable:$true] %s1910
          %1916 = dma.vmem_to_hbm [thread:$0]  %s1911, 256, %s1909, %s1897, 128, 128, 8
        $region116: #{tpu_custom_call.1} parent=103 // pred_fallthru
          _
      $region104: #{tpu_custom_call.1} parent=5 // pred_fallthru
        _
      %p1917 = scmp.le.s32.totalorder 2, %s37
      // Predicated region
      $region117: #{tpu_custom_call.1} parent=5 // pred_check
        %p1918 = pneg %p1917
      $region118: #{tpu_custom_call.1} parent=5 // pred_check_branch
        %1920 = sbr.rel (%p1918) target = $region120
      $region119: #{tpu_custom_call.1} parent=5 // pred_region
        %s1921 = ssub.s32 %s37, 2
        // Predicated region
        $region121: #{tpu_custom_call.1} parent=119 // pred_check
          %p1922 = pneg %p604
        $region122: #{tpu_custom_call.1} parent=119 // pred_check_branch
          %1924 = sbr.rel (%p1922) target = $region124
        $region123: #{tpu_custom_call.1} parent=119 // pred_region
          %s1925 = sand.u32 %s589, 1
          %s1926 = scalar_lea.sflag [#allocation7], %s1925
          %s1927 = sand.u32 %s589, 1
          %s1928 = smul.addr %s1927, 16
          %s1929 = scalar_lea.vmem [#allocation6], %s1928
          %1930 = dma.done %s1926, 256
        $region124: #{tpu_custom_call.1} parent=119 // pred_fallthru
          _
      $region120: #{tpu_custom_call.1} parent=5 // pred_fallthru
        _
    $region6: #{tpu_custom_call.1} parent=1 // loop_footer
      %s41 = sadd.s32 1, %s37
    $region7: #{tpu_custom_call.1} parent=1 // loop_footer_branch
      %36 = sbr.rel target = $region3
    $region8: #{tpu_custom_call.1} parent=1 // loop_exit
      _
    %1931 = vsyncpa [#allocation7], 1
    %s1932 = scalar_lea.sflag [#allocation7], 1
    %1933 = vsyncpa %s1932, 1

</llo_original>
